<compile_context>
chip_gen: v6e
topology: v6e:2x2x1
jax: 0.10.0
libtpu: 0.0.40
codegen_flags: <defaults>
</compile_context>

<pallas_src>
import math
from functools import partial

import jax
import jax.numpy as jnp
from jax.experimental import pallas as pl
from jax.experimental.pallas import tpu as pltpu


LANES = 128


def _derive_pack(in_dim: int, out_dim: int) -> int:
    """Smallest row-packing factor that makes both the hidden (pack*in_dim)
    and output (pack*out_dim) widths multiples of 128 lanes (unmasked vst)."""
    p_in = LANES // math.gcd(LANES, in_dim)
    p_out = LANES // math.gcd(LANES, out_dim)
    pack = (p_in * p_out) // math.gcd(p_in, p_out)  # lcm
    return pack


def _pick_tile(n_pk: int, max_tile_pk: int) -> int:
    """Packed-row tile size.

    Small inputs: one full-extent block (exempt from the 8-row block rule).
    Large inputs: big tiles (multiple of 8 packed rows), >= 2 grid steps so
    ("parallel",) dimension semantics can shard across v7x's two TensorCores;
    the ragged final block is masked by Pallas, no padding copy needed.
    """
    if n_pk <= max(16, max_tile_pk // 2):
        return n_pk
    half = (n_pk + 1) // 2
    tm = min(max_tile_pk, ((half + 7) // 8) * 8)
    return max(tm, 8)


def _decoder_mlp_kernel(x_ref, w1_ref, b1_ref, w2_ref, b2_ref, o_ref, *, act):
    """One row tile of: act(x @ W1 + b1) @ W2 + b2, fused in VMEM.

    Row-packed shapes: x (tm, pack*in_dim), W1 block-diagonal bf16
    (pack*in_dim, pack*in_dim), W2 block-diagonal bf16 (pack*in_dim,
    pack*out_dim), biases f32 (1, ...), output (tm, pack*out_dim) — lane-dense
    (multiple of 128) so stores are unmasked full-lane vst.
    """
    x = x_ref[...].astype(jnp.bfloat16)                              # free if already bf16
    h = jnp.dot(x, w1_ref[...], preferred_element_type=jnp.float32)  # MXU, bf16 in / f32 acc
    h = act(h + b1_ref[...])                                         # VPU + EUP, f32
    y = jnp.dot(h.astype(jnp.bfloat16), w2_ref[...],
                preferred_element_type=jnp.float32)                  # MXU
    o_ref[...] = (y + b2_ref[...]).astype(o_ref.dtype)


def make_decoder_forward(params, *, act=jax.nn.silu, combine=True,
                         max_tile_pk=1024):
    """Build the decoder forward.  Packed weights are prepared ONCE here
    (hoisted out of the per-forward path) and closed over by the jitted fn."""
    w1, b1, w2, b2 = params
    in_dim = int(w1.shape[0])
    out_dim = int(w2.shape[1])
    pack = _derive_pack(in_dim, out_dim)
    pk_in = pack * in_dim
    pk_out = pack * out_dim
    # Lane-density guard: the unmasked-store / full-K design only holds when
    # both packed widths are multiples of 128 and the pack factor is sane.
    assert pk_in % LANES == 0 and pk_out % LANES == 0, (pk_in, pk_out)
    if pack > 64:
        raise ValueError(
            f"in_dim={in_dim}, out_dim={out_dim} need pack={pack}; "
            "row-packed decoder kernel not supported for these dims.")

    # Block-diagonal weights (exact), bf16 for native MXU rate; f32 biases.
    eye = jnp.eye(pack, dtype=jnp.float32)
    w1p = jnp.kron(eye, jnp.asarray(w1, jnp.float32)).astype(jnp.bfloat16)
    w2p = jnp.kron(eye, jnp.asarray(w2, jnp.float32)).astype(jnp.bfloat16)
    b1p = jnp.tile(jnp.asarray(b1, jnp.float32).reshape(1, -1), (1, pack))
    b2p = jnp.tile(jnp.asarray(b2, jnp.float32).reshape(1, -1), (1, pack))

    kernel = partial(_decoder_mlp_kernel, act=act)

    def apply_one(x):
        n = x.shape[0]
        # Pad only to the pack (8-row) granularity the packed reshape needs;
        # skipped entirely when upstream rows are already pack-aligned.
        n_al = pl.cdiv(n, pack) * pack
        if n_al != n:
            x = jnp.pad(x, ((0, n_al - n), (0, 0)))
        n_pk = n_al // pack
        x_pk = x.reshape(n_pk, pk_in)          # free row-major reshape

        tm = _pick_tile(n_pk, max_tile_pk)
        grid = (pl.cdiv(n_pk, tm),)            # ragged last block masked by Pallas

        elt = jnp.dtype(x.dtype).itemsize
        cost = pl.CostEstimate(
            flops=2 * n_al * in_dim * (in_dim + out_dim),
            transcendentals=n_al * in_dim,
            bytes_accessed=(x_pk.size * elt + n_pk * pk_out * elt
                            + 2 * (w1p.size + w2p.size)
                            + 4 * (b1p.size + b2p.size)),
        )

        out_pk = pl.pallas_call(
            kernel,
            out_shape=jax.ShapeDtypeStruct((n_pk, pk_out), x.dtype),
            grid_spec=pltpu.PrefetchScalarGridSpec(
                num_scalar_prefetch=0,
                grid=grid,
                in_specs=[
                    pl.BlockSpec((tm, pk_in), lambda i: (i, 0)),      # x tile
                    pl.BlockSpec((pk_in, pk_in), lambda i: (0, 0)),   # W1 (resident)
                    pl.BlockSpec((1, pk_in), lambda i: (0, 0)),       # b1 (resident)
                    pl.BlockSpec((pk_in, pk_out), lambda i: (0, 0)),  # W2 (resident)
                    pl.BlockSpec((1, pk_out), lambda i: (0, 0)),      # b2 (resident)
                ],
                out_specs=pl.BlockSpec((tm, pk_out), lambda i: (i, 0)),
            ),
            compiler_params=pltpu.CompilerParams(
                dimension_semantics=("parallel",)),
            cost_estimate=cost,
        )(x_pk, w1p, b1p, w2p, b2p)

        out = out_pk.reshape(n_al, out_dim)    # free row-major unpack
        return out[:n] if n_al != n else out

    def forward(h_atm, h_bnd, h_ang):
        outs = [apply_one(h) for h in (h_atm, h_bnd, h_ang)]
        if combine:
            # Mirrors torch.cat((atm, bnd, ang), 0).
            return jnp.concatenate(outs, axis=0)
        return outs

    return jax.jit(forward)


def decoder_reference(h_atm, h_bnd, h_ang, params, act=jax.nn.silu):
    w1, b1, w2, b2 = params
    x = jnp.concatenate([h_atm, h_bnd, h_ang], axis=0)
    h = act(x @ w1 + b1.reshape(1, -1))
    return h @ w2 + b2.reshape(1, -1)


if __name__ == "__main__":
    # Small shapes consistent with the module: atom/bond/angle feature
    # matrices sharing in_dim; decoder MLP in_dim -> in_dim -> out_dim.
    in_dim, out_dim = 32, 16
    n_atm, n_bnd, n_ang = 64, 128, 192

    key = jax.random.PRNGKey(0)
    k_atm, k_bnd, k_ang, kw1, kb1, kw2, kb2 = jax.random.split(key, 7)

    h_atm = jax.random.normal(k_atm, (n_atm, in_dim), dtype=jnp.float32)
    h_bnd = jax.random.normal(k_bnd, (n_bnd, in_dim), dtype=jnp.float32)
    h_ang = jax.random.normal(k_ang, (n_ang, in_dim), dtype=jnp.float32)

    # Deterministic synthetic parameters (no checkpoint load).
    w1 = jax.random.normal(kw1, (in_dim, in_dim), dtype=jnp.float32) * 0.1
    b1 = jax.random.normal(kb1, (in_dim,), dtype=jnp.float32) * 0.1
    w2 = jax.random.normal(kw2, (in_dim, out_dim), dtype=jnp.float32) * 0.1
    b2 = jax.random.normal(kb2, (out_dim,), dtype=jnp.float32) * 0.1
    params = (w1, b1, w2, b2)

    fwd = make_decoder_forward(params, act=jax.nn.silu, combine=True)
    out = jax.block_until_ready(fwd(h_atm, h_bnd, h_ang))

    ref = decoder_reference(h_atm, h_bnd, h_ang, params, act=jax.nn.silu)
    assert out.shape == (n_atm + n_bnd + n_ang, out_dim), out.shape
    # bf16 matmul inputs with f32 accumulation vs a pure-f32 reference.
    err = float(jnp.max(jnp.abs(out - ref)))
    assert jnp.allclose(out, ref, atol=2e-2, rtol=2e-2), f"max abs err {err}"

    print("KERNEL_OK")
</pallas_src>

<mosaic_0001>
module attributes {stable_mosaic.version = 11 : i64} {
  func.func @_decoder_mlp_kernel(%arg0: i32, %arg1: memref<24x256xf32, #tpu.memory_space<vmem>>, %arg2: memref<256x256xbf16, #tpu.memory_space<vmem>>, %arg3: memref<1x256xf32, #tpu.memory_space<vmem>>, %arg4: memref<256x128xbf16, #tpu.memory_space<vmem>>, %arg5: memref<1x128xf32, #tpu.memory_space<vmem>>, %arg6: memref<24x128xf32, #tpu.memory_space<vmem>>) attributes {dimension_semantics = [#tpu.dimension_semantics<parallel>], iteration_bounds = array<i64: 1>, scalar_prefetch = 0 : i64, scratch_operands = 0 : i64, tpu.core_type = #tpu.core_type<tc>, window_params = [{transform_indices = @transform_0, window_bounds = array<i64: 24, 256>}, {pipeline_mode = #tpu.pipeline_mode<synchronous>, transform_indices = @transform_1, window_bounds = array<i64: 256, 256>}, {pipeline_mode = #tpu.pipeline_mode<synchronous>, transform_indices = @transform_2, window_bounds = array<i64: 1, 256>}, {pipeline_mode = #tpu.pipeline_mode<synchronous>, transform_indices = @transform_3, window_bounds = array<i64: 256, 128>}, {pipeline_mode = #tpu.pipeline_mode<synchronous>, transform_indices = @transform_4, window_bounds = array<i64: 1, 128>}, {transform_indices = @transform_5, window_bounds = array<i64: 24, 128>}]} {
    %c0 = arith.constant 0 : index
    %c0_0 = arith.constant 0 : index
    %0 = vector.load %arg1[%c0, %c0_0] : memref<24x256xf32, #tpu.memory_space<vmem>>, vector<24x256xf32>
    %1 = arith.truncf %0 : vector<24x256xf32> to vector<24x256xbf16>
    %c0_1 = arith.constant 0 : index
    %c0_2 = arith.constant 0 : index
    %2 = vector.load %arg2[%c0_1, %c0_2] : memref<256x256xbf16, #tpu.memory_space<vmem>>, vector<256x256xbf16>
    %cst = arith.constant dense<0.000000e+00> : vector<24x256xf32>
    %3 = tpu.matmul %1, %2, %cst {dimension_numbers = #tpu.dot_dimension_numbers<[1], [0], [0], [1], [0, 0, 1, 1], [], []>} : vector<24x256xbf16>, vector<256x256xbf16>, vector<24x256xf32> -> vector<24x256xf32>
    %c0_3 = arith.constant 0 : index
    %c0_4 = arith.constant 0 : index
    %4 = vector.load %arg3[%c0_3, %c0_4] : memref<1x256xf32, #tpu.memory_space<vmem>>, vector<1x256xf32>
    %5 = vector.broadcast %4 : vector<1x256xf32> to vector<24x256xf32>
    %6 = arith.addf %3, %5 : vector<24x256xf32>
    %7 = arith.negf %6 : vector<24x256xf32>
    %8 = math.exp %7 : vector<24x256xf32>
    %cst_5 = arith.constant 1.000000e+00 : f32
    %9 = vector.broadcast %cst_5 : f32 to vector<24x256xf32>
    %10 = arith.addf %9, %8 : vector<24x256xf32>
    %11 = arith.divf %9, %10 : vector<24x256xf32>
    %12 = arith.mulf %6, %11 : vector<24x256xf32>
    %13 = arith.truncf %12 : vector<24x256xf32> to vector<24x256xbf16>
    %c0_6 = arith.constant 0 : index
    %c0_7 = arith.constant 0 : index
    %14 = vector.load %arg4[%c0_6, %c0_7] : memref<256x128xbf16, #tpu.memory_space<vmem>>, vector<256x128xbf16>
    %cst_8 = arith.constant dense<0.000000e+00> : vector<24x128xf32>
    %15 = tpu.matmul %13, %14, %cst_8 {dimension_numbers = #tpu.dot_dimension_numbers<[1], [0], [0], [1], [0, 0, 1, 1], [], []>} : vector<24x256xbf16>, vector<256x128xbf16>, vector<24x128xf32> -> vector<24x128xf32>
    %c0_9 = arith.constant 0 : index
    %c0_10 = arith.constant 0 : index
    %16 = vector.load %arg5[%c0_9, %c0_10] : memref<1x128xf32, #tpu.memory_space<vmem>>, vector<1x128xf32>
    %17 = vector.broadcast %16 : vector<1x128xf32> to vector<24x128xf32>
    %18 = arith.addf %15, %17 : vector<24x128xf32>
    %c0_11 = arith.constant 0 : index
    %c0_12 = arith.constant 0 : index
    %19 = vector.load %arg6[%c0_11, %c0_12] : memref<24x128xf32, #tpu.memory_space<vmem>>, vector<24x128xf32>
    tpu.vector_store %arg6[%c0_11, %c0_12], %18 {strides = array<i32>} : memref<24x128xf32, #tpu.memory_space<vmem>>, vector<24x128xf32>,
    return
  }
  func.func @transform_0(%arg0: i32) -> (i32, i32) {
    %c0_i32 = arith.constant 0 : i32
    %c0_i32_0 = arith.constant 0 : i32
    return %arg0, %c0_i32 : i32, i32
  }
  func.func @transform_1(%arg0: i32) -> (i32, i32) {
    %c0_i32 = arith.constant 0 : i32
    %c0_i32_0 = arith.constant 0 : i32
    %c0_i32_1 = arith.constant 0 : i32
    return %c0_i32, %c0_i32_0 : i32, i32
  }
  func.func @transform_2(%arg0: i32) -> (i32, i32) {
    %c0_i32 = arith.constant 0 : i32
    %c0_i32_0 = arith.constant 0 : i32
    %c0_i32_1 = arith.constant 0 : i32
    return %c0_i32, %c0_i32_0 : i32, i32
  }
  func.func @transform_3(%arg0: i32) -> (i32, i32) {
    %c0_i32 = arith.constant 0 : i32
    %c0_i32_0 = arith.constant 0 : i32
    %c0_i32_1 = arith.constant 0 : i32
    return %c0_i32, %c0_i32_0 : i32, i32
  }
  func.func @transform_4(%arg0: i32) -> (i32, i32) {
    %c0_i32 = arith.constant 0 : i32
    %c0_i32_0 = arith.constant 0 : i32
    %c0_i32_1 = arith.constant 0 : i32
    return %c0_i32, %c0_i32_0 : i32, i32
  }
  func.func @transform_5(%arg0: i32) -> (i32, i32) {
    %c0_i32 = arith.constant 0 : i32
    %c0_i32_0 = arith.constant 0 : i32
    return %arg0, %c0_i32 : i32, i32
  }
}

module attributes {stable_mosaic.version = 11 : i64} {
  func.func @_decoder_mlp_kernel(%arg0: i32, %arg1: memref<16x256xf32, #tpu.memory_space<vmem>>, %arg2: memref<256x256xbf16, #tpu.memory_space<vmem>>, %arg3: memref<1x256xf32, #tpu.memory_space<vmem>>, %arg4: memref<256x128xbf16, #tpu.memory_space<vmem>>, %arg5: memref<1x128xf32, #tpu.memory_space<vmem>>, %arg6: memref<16x128xf32, #tpu.memory_space<vmem>>) attributes {dimension_semantics = [#tpu.dimension_semantics<parallel>], iteration_bounds = array<i64: 1>, scalar_prefetch = 0 : i64, scratch_operands = 0 : i64, tpu.core_type = #tpu.core_type<tc>, window_params = [{transform_indices = @transform_0, window_bounds = array<i64: 16, 256>}, {pipeline_mode = #tpu.pipeline_mode<synchronous>, transform_indices = @transform_1, window_bounds = array<i64: 256, 256>}, {pipeline_mode = #tpu.pipeline_mode<synchronous>, transform_indices = @transform_2, window_bounds = array<i64: 1, 256>}, {pipeline_mode = #tpu.pipeline_mode<synchronous>, transform_indices = @transform_3, window_bounds = array<i64: 256, 128>}, {pipeline_mode = #tpu.pipeline_mode<synchronous>, transform_indices = @transform_4, window_bounds = array<i64: 1, 128>}, {transform_indices = @transform_5, window_bounds = array<i64: 16, 128>}]} {
    %c0 = arith.constant 0 : index
    %c0_0 = arith.constant 0 : index
    %0 = vector.load %arg1[%c0, %c0_0] : memref<16x256xf32, #tpu.memory_space<vmem>>, vector<16x256xf32>
    %1 = arith.truncf %0 : vector<16x256xf32> to vector<16x256xbf16>
    %c0_1 = arith.constant 0 : index
    %c0_2 = arith.constant 0 : index
    %2 = vector.load %arg2[%c0_1, %c0_2] : memref<256x256xbf16, #tpu.memory_space<vmem>>, vector<256x256xbf16>
    %cst = arith.constant dense<0.000000e+00> : vector<16x256xf32>
    %3 = tpu.matmul %1, %2, %cst {dimension_numbers = #tpu.dot_dimension_numbers<[1], [0], [0], [1], [0, 0, 1, 1], [], []>} : vector<16x256xbf16>, vector<256x256xbf16>, vector<16x256xf32> -> vector<16x256xf32>
    %c0_3 = arith.constant 0 : index
    %c0_4 = arith.constant 0 : index
    %4 = vector.load %arg3[%c0_3, %c0_4] : memref<1x256xf32, #tpu.memory_space<vmem>>, vector<1x256xf32>
    %5 = vector.broadcast %4 : vector<1x256xf32> to vector<16x256xf32>
    %6 = arith.addf %3, %5 : vector<16x256xf32>
    %7 = arith.negf %6 : vector<16x256xf32>
    %8 = math.exp %7 : vector<16x256xf32>
    %cst_5 = arith.constant 1.000000e+00 : f32
    %9 = vector.broadcast %cst_5 : f32 to vector<16x256xf32>
    %10 = arith.addf %9, %8 : vector<16x256xf32>
    %11 = arith.divf %9, %10 : vector<16x256xf32>
    %12 = arith.mulf %6, %11 : vector<16x256xf32>
    %13 = arith.truncf %12 : vector<16x256xf32> to vector<16x256xbf16>
    %c0_6 = arith.constant 0 : index
    %c0_7 = arith.constant 0 : index
    %14 = vector.load %arg4[%c0_6, %c0_7] : memref<256x128xbf16, #tpu.memory_space<vmem>>, vector<256x128xbf16>
    %cst_8 = arith.constant dense<0.000000e+00> : vector<16x128xf32>
    %15 = tpu.matmul %13, %14, %cst_8 {dimension_numbers = #tpu.dot_dimension_numbers<[1], [0], [0], [1], [0, 0, 1, 1], [], []>} : vector<16x256xbf16>, vector<256x128xbf16>, vector<16x128xf32> -> vector<16x128xf32>
    %c0_9 = arith.constant 0 : index
    %c0_10 = arith.constant 0 : index
    %16 = vector.load %arg5[%c0_9, %c0_10] : memref<1x128xf32, #tpu.memory_space<vmem>>, vector<1x128xf32>
    %17 = vector.broadcast %16 : vector<1x128xf32> to vector<16x128xf32>
    %18 = arith.addf %15, %17 : vector<16x128xf32>
    %c0_11 = arith.constant 0 : index
    %c0_12 = arith.constant 0 : index
    %19 = vector.load %arg6[%c0_11, %c0_12] : memref<16x128xf32, #tpu.memory_space<vmem>>, vector<16x128xf32>
    tpu.vector_store %arg6[%c0_11, %c0_12], %18 {strides = array<i32>} : memref<16x128xf32, #tpu.memory_space<vmem>>, vector<16x128xf32>,
    return
  }
  func.func @transform_0(%arg0: i32) -> (i32, i32) {
    %c0_i32 = arith.constant 0 : i32
    %c0_i32_0 = arith.constant 0 : i32
    return %arg0, %c0_i32 : i32, i32
  }
  func.func @transform_1(%arg0: i32) -> (i32, i32) {
    %c0_i32 = arith.constant 0 : i32
    %c0_i32_0 = arith.constant 0 : i32
    %c0_i32_1 = arith.constant 0 : i32
    return %c0_i32, %c0_i32_0 : i32, i32
  }
  func.func @transform_2(%arg0: i32) -> (i32, i32) {
    %c0_i32 = arith.constant 0 : i32
    %c0_i32_0 = arith.constant 0 : i32
    %c0_i32_1 = arith.constant 0 : i32
    return %c0_i32, %c0_i32_0 : i32, i32
  }
  func.func @transform_3(%arg0: i32) -> (i32, i32) {
    %c0_i32 = arith.constant 0 : i32
    %c0_i32_0 = arith.constant 0 : i32
    %c0_i32_1 = arith.constant 0 : i32
    return %c0_i32, %c0_i32_0 : i32, i32
  }
  func.func @transform_4(%arg0: i32) -> (i32, i32) {
    %c0_i32 = arith.constant 0 : i32
    %c0_i32_0 = arith.constant 0 : i32
    %c0_i32_1 = arith.constant 0 : i32
    return %c0_i32, %c0_i32_0 : i32, i32
  }
  func.func @transform_5(%arg0: i32) -> (i32, i32) {
    %c0_i32 = arith.constant 0 : i32
    %c0_i32_0 = arith.constant 0 : i32
    return %arg0, %c0_i32 : i32, i32
  }
}

module attributes {stable_mosaic.version = 11 : i64} {
  func.func @_decoder_mlp_kernel(%arg0: i32, %arg1: memref<8x256xf32, #tpu.memory_space<vmem>>, %arg2: memref<256x256xbf16, #tpu.memory_space<vmem>>, %arg3: memref<1x256xf32, #tpu.memory_space<vmem>>, %arg4: memref<256x128xbf16, #tpu.memory_space<vmem>>, %arg5: memref<1x128xf32, #tpu.memory_space<vmem>>, %arg6: memref<8x128xf32, #tpu.memory_space<vmem>>) attributes {dimension_semantics = [#tpu.dimension_semantics<parallel>], iteration_bounds = array<i64: 1>, scalar_prefetch = 0 : i64, scratch_operands = 0 : i64, tpu.core_type = #tpu.core_type<tc>, window_params = [{transform_indices = @transform_0, window_bounds = array<i64: 8, 256>}, {pipeline_mode = #tpu.pipeline_mode<synchronous>, transform_indices = @transform_1, window_bounds = array<i64: 256, 256>}, {pipeline_mode = #tpu.pipeline_mode<synchronous>, transform_indices = @transform_2, window_bounds = array<i64: 1, 256>}, {pipeline_mode = #tpu.pipeline_mode<synchronous>, transform_indices = @transform_3, window_bounds = array<i64: 256, 128>}, {pipeline_mode = #tpu.pipeline_mode<synchronous>, transform_indices = @transform_4, window_bounds = array<i64: 1, 128>}, {transform_indices = @transform_5, window_bounds = array<i64: 8, 128>}]} {
    %c0 = arith.constant 0 : index
    %c0_0 = arith.constant 0 : index
    %0 = vector.load %arg1[%c0, %c0_0] : memref<8x256xf32, #tpu.memory_space<vmem>>, vector<8x256xf32>
    %1 = arith.truncf %0 : vector<8x256xf32> to vector<8x256xbf16>
    %c0_1 = arith.constant 0 : index
    %c0_2 = arith.constant 0 : index
    %2 = vector.load %arg2[%c0_1, %c0_2] : memref<256x256xbf16, #tpu.memory_space<vmem>>, vector<256x256xbf16>
    %cst = arith.constant dense<0.000000e+00> : vector<8x256xf32>
    %3 = tpu.matmul %1, %2, %cst {dimension_numbers = #tpu.dot_dimension_numbers<[1], [0], [0], [1], [0, 0, 1, 1], [], []>} : vector<8x256xbf16>, vector<256x256xbf16>, vector<8x256xf32> -> vector<8x256xf32>
    %c0_3 = arith.constant 0 : index
    %c0_4 = arith.constant 0 : index
    %4 = vector.load %arg3[%c0_3, %c0_4] : memref<1x256xf32, #tpu.memory_space<vmem>>, vector<1x256xf32>
    %5 = vector.broadcast %4 : vector<1x256xf32> to vector<8x256xf32>
    %6 = arith.addf %3, %5 : vector<8x256xf32>
    %7 = arith.negf %6 : vector<8x256xf32>
    %8 = math.exp %7 : vector<8x256xf32>
    %cst_5 = arith.constant 1.000000e+00 : f32
    %9 = vector.broadcast %cst_5 : f32 to vector<8x256xf32>
    %10 = arith.addf %9, %8 : vector<8x256xf32>
    %11 = arith.divf %9, %10 : vector<8x256xf32>
    %12 = arith.mulf %6, %11 : vector<8x256xf32>
    %13 = arith.truncf %12 : vector<8x256xf32> to vector<8x256xbf16>
    %c0_6 = arith.constant 0 : index
    %c0_7 = arith.constant 0 : index
    %14 = vector.load %arg4[%c0_6, %c0_7] : memref<256x128xbf16, #tpu.memory_space<vmem>>, vector<256x128xbf16>
    %cst_8 = arith.constant dense<0.000000e+00> : vector<8x128xf32>
    %15 = tpu.matmul %13, %14, %cst_8 {dimension_numbers = #tpu.dot_dimension_numbers<[1], [0], [0], [1], [0, 0, 1, 1], [], []>} : vector<8x256xbf16>, vector<256x128xbf16>, vector<8x128xf32> -> vector<8x128xf32>
    %c0_9 = arith.constant 0 : index
    %c0_10 = arith.constant 0 : index
    %16 = vector.load %arg5[%c0_9, %c0_10] : memref<1x128xf32, #tpu.memory_space<vmem>>, vector<1x128xf32>
    %17 = vector.broadcast %16 : vector<1x128xf32> to vector<8x128xf32>
    %18 = arith.addf %15, %17 : vector<8x128xf32>
    %c0_11 = arith.constant 0 : index
    %c0_12 = arith.constant 0 : index
    %19 = vector.load %arg6[%c0_11, %c0_12] : memref<8x128xf32, #tpu.memory_space<vmem>>, vector<8x128xf32>
    tpu.vector_store %arg6[%c0_11, %c0_12], %18 {strides = array<i32>} : memref<8x128xf32, #tpu.memory_space<vmem>>, vector<8x128xf32>,
    return
  }
  func.func @transform_0(%arg0: i32) -> (i32, i32) {
    %c0_i32 = arith.constant 0 : i32
    %c0_i32_0 = arith.constant 0 : i32
    return %arg0, %c0_i32 : i32, i32
  }
  func.func @transform_1(%arg0: i32) -> (i32, i32) {
    %c0_i32 = arith.constant 0 : i32
    %c0_i32_0 = arith.constant 0 : i32
    %c0_i32_1 = arith.constant 0 : i32
    return %c0_i32, %c0_i32_0 : i32, i32
  }
  func.func @transform_2(%arg0: i32) -> (i32, i32) {
    %c0_i32 = arith.constant 0 : i32
    %c0_i32_0 = arith.constant 0 : i32
    %c0_i32_1 = arith.constant 0 : i32
    return %c0_i32, %c0_i32_0 : i32, i32
  }
  func.func @transform_3(%arg0: i32) -> (i32, i32) {
    %c0_i32 = arith.constant 0 : i32
    %c0_i32_0 = arith.constant 0 : i32
    %c0_i32_1 = arith.constant 0 : i32
    return %c0_i32, %c0_i32_0 : i32, i32
  }
  func.func @transform_4(%arg0: i32) -> (i32, i32) {
    %c0_i32 = arith.constant 0 : i32
    %c0_i32_0 = arith.constant 0 : i32
    %c0_i32_1 = arith.constant 0 : i32
    return %c0_i32, %c0_i32_0 : i32, i32
  }
  func.func @transform_5(%arg0: i32) -> (i32, i32) {
    %c0_i32 = arith.constant 0 : i32
    %c0_i32_0 = arith.constant 0 : i32
    return %arg0, %c0_i32 : i32, i32
  }
}

</mosaic_0001>

<llo_original>
// kernel: forward.5
$region0: #{forward.5}
  #allocation0 [shape = 'u32[]', space=smem, size = 0x4, offset = 0x4, fixed_abs, tag = 'smem constant byte address 0x4 - core index']
  #allocation1 [shape = 'u32[144,128]{1,0:T(1,128)}', space=vmem, size = 0x12000, scoped, tag = 'internal scratch']
  %s0 = inlined_call_operand.vmem [shape: f32[24,256], index: 0, kind: input, shape index: {}]
  %s1 = inlined_call_operand.vmem [shape: bf16[256,256], index: 1, kind: input, shape index: {}]
  %s2 = inlined_call_operand.vmem [shape: f32[1,256], index: 2, kind: input, shape index: {}]
  %s3 = inlined_call_operand.vmem [shape: bf16[256,128], index: 3, kind: input, shape index: {}]
  %s4 = inlined_call_operand.vmem [shape: f32[1,128], index: 4, kind: input, shape index: {}]
  %s5 = inlined_call_operand.vmem [shape: f32[24,128], index: 5, kind: output, shape index: {}]
  %s6 = sld [smem:[#allocation0]]
  $region30: #{forward.5} parent=0
    _
  %s8 = ssub.s32 1, %s6
  %s9 = scalar_select 0, %s8, %s6
  // Predicated region
  $region2: #{forward.5} parent=0 // pred_check
    _
  $region3: #{forward.5} parent=0 // pred_check_branch
    %11 = sbr.rel (0) target = $region5
  $region4: #{forward.5} parent=0 // pred_region
    _
  $region5: #{forward.5} parent=0 // pred_fallthru
    _
  // Predicated region
  $region6: #{forward.5} parent=0 // pred_check
    _
  $region7: #{forward.5} parent=0 // pred_check_branch
    %13 = sbr.rel (0) target = $region9
  $region8: #{forward.5} parent=0 // pred_region
    _
  $region9: #{forward.5} parent=0 // pred_fallthru
    _
  // Predicated region
  $region10: #{forward.5} parent=0 // pred_check
    _
  $region11: #{forward.5} parent=0 // pred_check_branch
    %15 = sbr.rel (0) target = $region13
  $region12: #{forward.5} parent=0 // pred_region
    _
  $region13: #{forward.5} parent=0 // pred_fallthru
    _
  // Predicated region
  $region14: #{forward.5} parent=0 // pred_check
    _
  $region15: #{forward.5} parent=0 // pred_check_branch
    %17 = sbr.rel (0) target = $region17
  $region16: #{forward.5} parent=0 // pred_region
    _
  $region17: #{forward.5} parent=0 // pred_fallthru
    _
  // Predicated region
  $region18: #{forward.5} parent=0 // pred_check
    _
  $region19: #{forward.5} parent=0 // pred_check_branch
    %19 = sbr.rel (0) target = $region21
  $region20: #{forward.5} parent=0 // pred_region
    _
  $region21: #{forward.5} parent=0 // pred_fallthru
    _
  %v21 = vld [vmem:[%s0] sm:$0xff]
  %v22 = vld [vmem:[%s0 + $0x8] sm:$0xff]
  %v23 = vld [vmem:[%s0 + $0x10] sm:$0xff]
  %v24 = vld [vmem:[%s0 + $0x18] sm:$0xff]
  %v25 = vld [vmem:[%s0 + $0x20] sm:$0xff]
  %v26 = vld [vmem:[%s0 + $0x28] sm:$0xff]
  %v27 = vpack.c.bf16 %v23, %v21
  %v28 = vpack.c.bf16 %v24, %v22
  %v29 = vpack.c.bf16 %v25, %v25
  %v30 = vpack.c.bf16 %v26, %v26
  %v31 = vld [vmem:[%s1] sm:$0xff]
  %v32 = vld [vmem:[%s1 + $0x8] sm:$0xff]
  %v33 = vld [vmem:[%s1 + $0x10] sm:$0xff]
  %v34 = vld [vmem:[%s1 + $0x18] sm:$0xff]
  %v35 = vld [vmem:[%s1 + $0x20] sm:$0xff]
  %v36 = vld [vmem:[%s1 + $0x28] sm:$0xff]
  %v37 = vld [vmem:[%s1 + $0x30] sm:$0xff]
  %v38 = vld [vmem:[%s1 + $0x38] sm:$0xff]
  %v39 = vld [vmem:[%s1 + $0x40] sm:$0xff]
  %v40 = vld [vmem:[%s1 + $0x48] sm:$0xff]
  %v41 = vld [vmem:[%s1 + $0x50] sm:$0xff]
  %v42 = vld [vmem:[%s1 + $0x58] sm:$0xff]
  %v43 = vld [vmem:[%s1 + $0x60] sm:$0xff]
  %v44 = vld [vmem:[%s1 + $0x68] sm:$0xff]
  %v45 = vld [vmem:[%s1 + $0x70] sm:$0xff]
  %v46 = vld [vmem:[%s1 + $0x78] sm:$0xff]
  %v47 = vld [vmem:[%s1 + $0x80] sm:$0xff]
  %v48 = vld [vmem:[%s1 + $0x88] sm:$0xff]
  %v49 = vld [vmem:[%s1 + $0x90] sm:$0xff]
  %v50 = vld [vmem:[%s1 + $0x98] sm:$0xff]
  %v51 = vld [vmem:[%s1 + $0xa0] sm:$0xff]
  %v52 = vld [vmem:[%s1 + $0xa8] sm:$0xff]
  %v53 = vld [vmem:[%s1 + $0xb0] sm:$0xff]
  %v54 = vld [vmem:[%s1 + $0xb8] sm:$0xff]
  %v55 = vld [vmem:[%s1 + $0xc0] sm:$0xff]
  %v56 = vld [vmem:[%s1 + $0xc8] sm:$0xff]
  %v57 = vld [vmem:[%s1 + $0xd0] sm:$0xff]
  %v58 = vld [vmem:[%s1 + $0xd8] sm:$0xff]
  %v59 = vld [vmem:[%s1 + $0xe0] sm:$0xff]
  %v60 = vld [vmem:[%s1 + $0xe8] sm:$0xff]
  %v61 = vld [vmem:[%s1 + $0xf0] sm:$0xff]
  %v62 = vld [vmem:[%s1 + $0xf8] sm:$0xff]
  %v63 = vld [vmem:[%s2] sm:$0x3]
  %v65 = vlaneseq
  %v66 = vshrl.u32 %v65, 7
  %v67 = vsub.s32 0, %v66
  %v68 = vrot.slane %v63, %v67
  %v69 = vlaneseq
  %v70 = vshrl.u32 %v69, 7
  %v71 = vsub.s32 1, %v70
  %v72 = vrot.slane %v63, %v71
  %v107 = vunpack.c.l.b16 %v31
  %v108 = vunpack.c.h.b16 %v31
  %v109 = vunpack.c.l.b16 %v32
  %v110 = vunpack.c.h.b16 %v32
  %v111 = vunpack.c.l.b16 %v33
  %v112 = vunpack.c.h.b16 %v33
  %v113 = vunpack.c.l.b16 %v34
  %v114 = vunpack.c.h.b16 %v34
  %v115 = vunpack.c.l.b16 %v35
  %v116 = vunpack.c.h.b16 %v35
  %v117 = vunpack.c.l.b16 %v36
  %v118 = vunpack.c.h.b16 %v36
  %v119 = vunpack.c.l.b16 %v37
  %v120 = vunpack.c.h.b16 %v37
  %v121 = vunpack.c.l.b16 %v38
  %v122 = vunpack.c.h.b16 %v38
  %v123 = vunpack.c.l.b16 %v39
  %v124 = vunpack.c.h.b16 %v39
  %v125 = vunpack.c.l.b16 %v40
  %v126 = vunpack.c.h.b16 %v40
  %v127 = vunpack.c.l.b16 %v41
  %v128 = vunpack.c.h.b16 %v41
  %v129 = vunpack.c.l.b16 %v42
  %v130 = vunpack.c.h.b16 %v42
  %v131 = vunpack.c.l.b16 %v43
  %v132 = vunpack.c.h.b16 %v43
  %v133 = vunpack.c.l.b16 %v44
  %v134 = vunpack.c.h.b16 %v44
  %v135 = vunpack.c.l.b16 %v45
  %v136 = vunpack.c.h.b16 %v45
  %v137 = vunpack.c.l.b16 %v46
  %v138 = vunpack.c.h.b16 %v46
  %v139 = vunpack.c.l.b16 %v47
  %v140 = vunpack.c.h.b16 %v47
  %v141 = vunpack.c.l.b16 %v48
  %v142 = vunpack.c.h.b16 %v48
  %v143 = vunpack.c.l.b16 %v49
  %v144 = vunpack.c.h.b16 %v49
  %v145 = vunpack.c.l.b16 %v50
  %v146 = vunpack.c.h.b16 %v50
  %v147 = vunpack.c.l.b16 %v51
  %v148 = vunpack.c.h.b16 %v51
  %v149 = vunpack.c.l.b16 %v52
  %v150 = vunpack.c.h.b16 %v52
  %v151 = vunpack.c.l.b16 %v53
  %v152 = vunpack.c.h.b16 %v53
  %v153 = vunpack.c.l.b16 %v54
  %v154 = vunpack.c.h.b16 %v54
  %v155 = vunpack.c.l.b16 %v55
  %v156 = vunpack.c.h.b16 %v55
  %v157 = vunpack.c.l.b16 %v56
  %v158 = vunpack.c.h.b16 %v56
  %v159 = vunpack.c.l.b16 %v57
  %v160 = vunpack.c.h.b16 %v57
  %v161 = vunpack.c.l.b16 %v58
  %v162 = vunpack.c.h.b16 %v58
  %v163 = vunpack.c.l.b16 %v59
  %v164 = vunpack.c.h.b16 %v59
  %v165 = vunpack.c.l.b16 %v60
  %v166 = vunpack.c.h.b16 %v60
  %v167 = vunpack.c.l.b16 %v61
  %v168 = vunpack.c.h.b16 %v61
  %v169 = vunpack.c.l.b16 %v62
  %v170 = vunpack.c.h.b16 %v62
  %v171 = vpack.c.b16 %v109, %v107
  %v172 = vpack.c.b16 %v110, %v108
  %v173 = vpack.c.b16 %v113, %v111
  %v174 = vpack.c.b16 %v114, %v112
  %v175 = vpack.c.b16 %v117, %v115
  %v176 = vpack.c.b16 %v118, %v116
  %v177 = vpack.c.b16 %v121, %v119
  %v178 = vpack.c.b16 %v122, %v120
  %v179 = vpack.c.b16 %v125, %v123
  %v180 = vpack.c.b16 %v126, %v124
  %v181 = vpack.c.b16 %v129, %v127
  %v182 = vpack.c.b16 %v130, %v128
  %v183 = vpack.c.b16 %v133, %v131
  %v184 = vpack.c.b16 %v134, %v132
  %v185 = vpack.c.b16 %v137, %v135
  %v186 = vpack.c.b16 %v138, %v136
  %v187 = vpack.c.b16 %v141, %v139
  %v188 = vpack.c.b16 %v142, %v140
  %v189 = vpack.c.b16 %v145, %v143
  %v190 = vpack.c.b16 %v146, %v144
  %v191 = vpack.c.b16 %v149, %v147
  %v192 = vpack.c.b16 %v150, %v148
  %v193 = vpack.c.b16 %v153, %v151
  %v194 = vpack.c.b16 %v154, %v152
  %v195 = vpack.c.b16 %v157, %v155
  %v196 = vpack.c.b16 %v158, %v156
  %v197 = vpack.c.b16 %v161, %v159
  %v198 = vpack.c.b16 %v162, %v160
  %v199 = vpack.c.b16 %v165, %v163
  %v200 = vpack.c.b16 %v166, %v164
  %v201 = vpack.c.b16 %v169, %v167
  %v202 = vpack.c.b16 %v170, %v168
  %235 = vmatprep.subr.bf16.mxu0 %v186
  %236 = vmatpush1.bf16.msra.mxu0 %v185
  %237 = vmatprep.subr.bf16.mxu0 %v184
  %238 = vmatpush1.bf16.msra.mxu0 %v183
  %239 = vmatprep.subr.bf16.mxu0 %v182
  %240 = vmatpush1.bf16.msra.mxu0 %v181
  %241 = vmatprep.subr.bf16.mxu0 %v180
  %242 = vmatpush1.bf16.msra.mxu0 %v179
  %243 = vmatprep.subr.bf16.mxu0 %v178
  %244 = vmatpush1.bf16.msra.mxu0 %v177
  %245 = vmatprep.subr.bf16.mxu0 %v176
  %246 = vmatpush1.bf16.msra.mxu0 %v175
  %247 = vmatprep.subr.bf16.mxu0 %v174
  %248 = vmatpush1.bf16.msra.mxu0 %v173
  %249 = vmatprep.subr.bf16.mxu0 %v172
  %250 = vmatpush1.bf16.msra.mxu0 %v171
  %251 = vmatprep.subr.bf16.mxu0 %v202
  %252 = vmatpush2.bf16.msra.mxu0 %v201
  %253 = vmatprep.subr.bf16.mxu0 %v200
  %254 = vmatpush2.bf16.msra.mxu0 %v199
  %255 = vmatprep.subr.bf16.mxu0 %v198
  %256 = vmatpush2.bf16.msra.mxu0 %v197
  %257 = vmatprep.subr.bf16.mxu0 %v196
  %258 = vmatpush2.bf16.msra.mxu0 %v195
  %259 = vmatprep.subr.bf16.mxu0 %v194
  %260 = vmatpush2.bf16.msra.mxu0 %v193
  %261 = vmatprep.subr.bf16.mxu0 %v192
  %262 = vmatpush2.bf16.msra.mxu0 %v191
  %263 = vmatprep.subr.bf16.mxu0 %v190
  %264 = vmatpush2.bf16.msra.mxu0 %v189
  %265 = vmatprep.subr.bf16.mxu0 %v188
  %266 = vmatpush2.bf16.msra.mxu0 %v187
  %267 = vmatprep.mubr.bf16.mxu0 %v28
  %268 = vmatmul.mubr.bf16.gmra.mxu0 %v27
  %v269 = vpop.f32.mrf.mxu0
  %v270 = vadd.f32 %v68, %v269
  %v271 = vpop.f32.mrf.mxu0
  %v272 = vadd.f32 %v72, %v271
  %v273 = vpop.f32.mrf.mxu0
  %v274 = vadd.f32 %v68, %v273
  %v275 = vpop.f32.mrf.mxu0
  %v276 = vadd.f32 %v72, %v275
  %277 = vmatprep.mubr.bf16.mxu0 %v30
  %278 = vmatmul.mubr.bf16.gmra.mxu0 %v29
  %v279 = vpop.f32.mrf.mxu0
  %v280 = vadd.f32 %v68, %v279
  %v281 = vpop.f32.mrf.mxu0
  %v282 = vadd.f32 %v72, %v281
  %v283 = vpop.f32.mrf.mxu0
  %v284 = vpop.f32.mrf.mxu0
  %285 = vdwg.mxu0
  %v286 = vxor.u32 %v270, 2147483648
  %v287 = vxor.u32 %v272, 2147483648
  %v288 = vxor.u32 %v274, 2147483648
  %v289 = vxor.u32 %v276, 2147483648
  %v290 = vxor.u32 %v280, 2147483648
  %v291 = vxor.u32 %v282, 2147483648
  %v292 = vmul.f32 %v286, 1.442695
  %v293 = vpow.pop %v292
  %v294 = vmul.f32 %v287, 1.442695
  %v295 = vpow.pop %v294
  %v296 = vmul.f32 %v288, 1.442695
  %v297 = vpow.pop %v296
  %v298 = vmul.f32 %v289, 1.442695
  %v299 = vpow.pop %v298
  %v300 = vmul.f32 %v290, 1.442695
  %v301 = vpow.pop %v300
  %v302 = vmul.f32 %v291, 1.442695
  %v303 = vpow.pop %v302
  %v304 = vadd.f32 %v293, 1.0
  %v305 = vadd.f32 %v295, 1.0
  %v306 = vadd.f32 %v297, 1.0
  %v307 = vadd.f32 %v299, 1.0
  %v308 = vadd.f32 %v301, 1.0
  %v309 = vadd.f32 %v303, 1.0
  %v310 = vrcp.pop %v304
  %v311 = vmul.f32 1.0, %v310
  %v312 = vrcp.pop %v305
  %v313 = vmul.f32 1.0, %v312
  %v314 = vrcp.pop %v306
  %v315 = vmul.f32 1.0, %v314
  %v316 = vrcp.pop %v307
  %v317 = vmul.f32 1.0, %v316
  %v318 = vrcp.pop %v308
  %v319 = vmul.f32 1.0, %v318
  %v320 = vrcp.pop %v309
  %v321 = vmul.f32 1.0, %v320
  %v322 = vmul.f32 %v270, %v311
  %v323 = vmul.f32 %v272, %v313
  %v324 = vmul.f32 %v274, %v315
  %v325 = vmul.f32 %v276, %v317
  %v326 = vmul.f32 %v280, %v319
  %v327 = vmul.f32 %v282, %v321
  %v328 = vpack.c.bf16 %v324, %v322
  %v329 = vpack.c.bf16 %v325, %v323
  %v330 = vpack.c.bf16 %v326, %v326
  %v331 = vpack.c.bf16 %v327, %v327
  %v332 = vld [vmem:[%s3] sm:$0xf]
  %v333 = vld [vmem:[%s3 + $0x4] sm:$0xf]
  %v334 = vld [vmem:[%s3 + $0x8] sm:$0xf]
  %v335 = vld [vmem:[%s3 + $0xc] sm:$0xf]
  %v336 = vld [vmem:[%s3 + $0x10] sm:$0xf]
  %v337 = vld [vmem:[%s3 + $0x14] sm:$0xf]
  %v338 = vld [vmem:[%s3 + $0x18] sm:$0xf]
  %v339 = vld [vmem:[%s3 + $0x1c] sm:$0xf]
  %v340 = vld [vmem:[%s3 + $0x20] sm:$0xf]
  %v341 = vld [vmem:[%s3 + $0x24] sm:$0xf]
  %v342 = vld [vmem:[%s3 + $0x28] sm:$0xf]
  %v343 = vld [vmem:[%s3 + $0x2c] sm:$0xf]
  %v344 = vld [vmem:[%s3 + $0x30] sm:$0xf]
  %v345 = vld [vmem:[%s3 + $0x34] sm:$0xf]
  %v346 = vld [vmem:[%s3 + $0x38] sm:$0xf]
  %v347 = vld [vmem:[%s3 + $0x3c] sm:$0xf]
  %v348 = vld [vmem:[%s3 + $0x40] sm:$0xf]
  %v349 = vld [vmem:[%s3 + $0x44] sm:$0xf]
  %v350 = vld [vmem:[%s3 + $0x48] sm:$0xf]
  %v351 = vld [vmem:[%s3 + $0x4c] sm:$0xf]
  %v352 = vld [vmem:[%s3 + $0x50] sm:$0xf]
  %v353 = vld [vmem:[%s3 + $0x54] sm:$0xf]
  %v354 = vld [vmem:[%s3 + $0x58] sm:$0xf]
  %v355 = vld [vmem:[%s3 + $0x5c] sm:$0xf]
  %v356 = vld [vmem:[%s3 + $0x60] sm:$0xf]
  %v357 = vld [vmem:[%s3 + $0x64] sm:$0xf]
  %v358 = vld [vmem:[%s3 + $0x68] sm:$0xf]
  %v359 = vld [vmem:[%s3 + $0x6c] sm:$0xf]
  %v360 = vld [vmem:[%s3 + $0x70] sm:$0xf]
  %v361 = vld [vmem:[%s3 + $0x74] sm:$0xf]
  %v362 = vld [vmem:[%s3 + $0x78] sm:$0xf]
  %v363 = vld [vmem:[%s3 + $0x7c] sm:$0xf]
  %v364 = vld [vmem:[%s4] sm:$0x1]
  %v366 = vlaneseq
  %v367 = vshrl.u32 %v366, 7
  %v368 = vsub.s32 0, %v367
  %v369 = vrot.slane %v364, %v368
  %v403 = vunpack.c.l.b16 %v332
  %v404 = vunpack.c.l.b16 %v333
  %v405 = vunpack.c.l.b16 %v334
  %v406 = vunpack.c.l.b16 %v335
  %v407 = vunpack.c.l.b16 %v336
  %v408 = vunpack.c.l.b16 %v337
  %v409 = vunpack.c.l.b16 %v338
  %v410 = vunpack.c.l.b16 %v339
  %v411 = vunpack.c.l.b16 %v340
  %v412 = vunpack.c.l.b16 %v341
  %v413 = vunpack.c.l.b16 %v342
  %v414 = vunpack.c.l.b16 %v343
  %v415 = vunpack.c.l.b16 %v344
  %v416 = vunpack.c.l.b16 %v345
  %v417 = vunpack.c.l.b16 %v346
  %v418 = vunpack.c.l.b16 %v347
  %v419 = vunpack.c.l.b16 %v348
  %v420 = vunpack.c.l.b16 %v349
  %v421 = vunpack.c.l.b16 %v350
  %v422 = vunpack.c.l.b16 %v351
  %v423 = vunpack.c.l.b16 %v352
  %v424 = vunpack.c.l.b16 %v353
  %v425 = vunpack.c.l.b16 %v354
  %v426 = vunpack.c.l.b16 %v355
  %v427 = vunpack.c.l.b16 %v356
  %v428 = vunpack.c.l.b16 %v357
  %v429 = vunpack.c.l.b16 %v358
  %v430 = vunpack.c.l.b16 %v359
  %v431 = vunpack.c.l.b16 %v360
  %v432 = vunpack.c.l.b16 %v361
  %v433 = vunpack.c.l.b16 %v362
  %v434 = vunpack.c.l.b16 %v363
  %v435 = vpack.c.b16 %v404, %v403
  %v436 = vpack.c.b16 %v406, %v405
  %v437 = vpack.c.b16 %v408, %v407
  %v438 = vpack.c.b16 %v410, %v409
  %v439 = vpack.c.b16 %v412, %v411
  %v440 = vpack.c.b16 %v414, %v413
  %v441 = vpack.c.b16 %v416, %v415
  %v442 = vpack.c.b16 %v418, %v417
  %v443 = vpack.c.b16 %v420, %v419
  %v444 = vpack.c.b16 %v422, %v421
  %v445 = vpack.c.b16 %v424, %v423
  %v446 = vpack.c.b16 %v426, %v425
  %v447 = vpack.c.b16 %v428, %v427
  %v448 = vpack.c.b16 %v430, %v429
  %v449 = vpack.c.b16 %v432, %v431
  %v450 = vpack.c.b16 %v434, %v433
  %467 = vmatprep.subr.bf16.mxu0 0
  %468 = vmatpush1.bf16.msra.mxu0 %v442
  %469 = vmatprep.subr.bf16.mxu0 0
  %470 = vmatpush1.bf16.msra.mxu0 %v441
  %471 = vmatprep.subr.bf16.mxu0 0
  %472 = vmatpush1.bf16.msra.mxu0 %v440
  %473 = vmatprep.subr.bf16.mxu0 0
  %474 = vmatpush1.bf16.msra.mxu0 %v439
  %475 = vmatprep.subr.bf16.mxu0 0
  %476 = vmatpush1.bf16.msra.mxu0 %v438
  %477 = vmatprep.subr.bf16.mxu0 0
  %478 = vmatpush1.bf16.msra.mxu0 %v437
  %479 = vmatprep.subr.bf16.mxu0 0
  %480 = vmatpush1.bf16.msra.mxu0 %v436
  %481 = vmatprep.subr.bf16.mxu0 0
  %482 = vmatpush1.bf16.msra.mxu0 %v435
  %483 = vmatprep.subr.bf16.mxu0 0
  %484 = vmatpush2.bf16.msra.mxu0 %v450
  %485 = vmatprep.subr.bf16.mxu0 0
  %486 = vmatpush2.bf16.msra.mxu0 %v449
  %487 = vmatprep.subr.bf16.mxu0 0
  %488 = vmatpush2.bf16.msra.mxu0 %v448
  %489 = vmatprep.subr.bf16.mxu0 0
  %490 = vmatpush2.bf16.msra.mxu0 %v447
  %491 = vmatprep.subr.bf16.mxu0 0
  %492 = vmatpush2.bf16.msra.mxu0 %v446
  %493 = vmatprep.subr.bf16.mxu0 0
  %494 = vmatpush2.bf16.msra.mxu0 %v445
  %495 = vmatprep.subr.bf16.mxu0 0
  %496 = vmatpush2.bf16.msra.mxu0 %v444
  %497 = vmatprep.subr.bf16.mxu0 0
  %498 = vmatpush2.bf16.msra.mxu0 %v443
  %499 = vmatprep.mubr.bf16.mxu0 %v329
  %500 = vmatmul.mubr.bf16.gmra.mxu0 %v328
  %v501 = vpop.f32.mrf.mxu0
  %v502 = vadd.f32 %v369, %v501
  %v503 = vpop.f32.mrf.mxu0
  %v504 = vpop.f32.mrf.mxu0
  %v505 = vadd.f32 %v369, %v504
  %v506 = vpop.f32.mrf.mxu0
  %507 = vmatprep.mubr.bf16.mxu0 %v331
  %508 = vmatmul.mubr.bf16.gmra.mxu0 %v330
  %v509 = vpop.f32.mrf.mxu0
  %v510 = vadd.f32 %v369, %v509
  %v511 = vpop.f32.mrf.mxu0
  %v512 = vpop.f32.mrf.mxu0
  %v513 = vpop.f32.mrf.mxu0
  %514 = vdwg.mxu0
  %515 = vst [vmem:[%s5] sm:$0xff] %v502
  %516 = vst [vmem:[%s5 + $0x8] sm:$0xff] %v505
  %517 = vst [vmem:[%s5 + $0x10] sm:$0xff] %v510
  // Predicated region
  $region22: #{forward.5} parent=0 // pred_check
    _
  $region23: #{forward.5} parent=0 // pred_check_branch
    %519 = sbr.rel (0) target = $region25
  $region24: #{forward.5} parent=0 // pred_region
    _
  $region25: #{forward.5} parent=0 // pred_fallthru
    _
  // Predicated region
  $region26: #{forward.5} parent=0 // pred_check
    _
  $region27: #{forward.5} parent=0 // pred_check_branch
    %521 = sbr.rel (0) target = $region29
  $region28: #{forward.5} parent=0 // pred_region
    _
  $region29: #{forward.5} parent=0 // pred_fallthru
    _

// kernel: forward.4
$region0: #{forward.4}
  #allocation0 [shape = 'u32[]', space=smem, size = 0x4, offset = 0x4, fixed_abs, tag = 'smem constant byte address 0x4 - core index']
  #allocation1 [shape = 'u32[144,128]{1,0:T(1,128)}', space=vmem, size = 0x12000, scoped, tag = 'internal scratch']
  %s0 = inlined_call_operand.vmem [shape: f32[16,256], index: 0, kind: input, shape index: {}]
  %s1 = inlined_call_operand.vmem [shape: bf16[256,256], index: 1, kind: input, shape index: {}]
  %s2 = inlined_call_operand.vmem [shape: f32[1,256], index: 2, kind: input, shape index: {}]
  %s3 = inlined_call_operand.vmem [shape: bf16[256,128], index: 3, kind: input, shape index: {}]
  %s4 = inlined_call_operand.vmem [shape: f32[1,128], index: 4, kind: input, shape index: {}]
  %s5 = inlined_call_operand.vmem [shape: f32[16,128], index: 5, kind: output, shape index: {}]
  %s6 = sld [smem:[#allocation0]]
  $region30: #{forward.4} parent=0
    _
  %s8 = ssub.s32 1, %s6
  %s9 = scalar_select 0, %s8, %s6
  // Predicated region
  $region2: #{forward.4} parent=0 // pred_check
    _
  $region3: #{forward.4} parent=0 // pred_check_branch
    %11 = sbr.rel (0) target = $region5
  $region4: #{forward.4} parent=0 // pred_region
    _
  $region5: #{forward.4} parent=0 // pred_fallthru
    _
  // Predicated region
  $region6: #{forward.4} parent=0 // pred_check
    _
  $region7: #{forward.4} parent=0 // pred_check_branch
    %13 = sbr.rel (0) target = $region9
  $region8: #{forward.4} parent=0 // pred_region
    _
  $region9: #{forward.4} parent=0 // pred_fallthru
    _
  // Predicated region
  $region10: #{forward.4} parent=0 // pred_check
    _
  $region11: #{forward.4} parent=0 // pred_check_branch
    %15 = sbr.rel (0) target = $region13
  $region12: #{forward.4} parent=0 // pred_region
    _
  $region13: #{forward.4} parent=0 // pred_fallthru
    _
  // Predicated region
  $region14: #{forward.4} parent=0 // pred_check
    _
  $region15: #{forward.4} parent=0 // pred_check_branch
    %17 = sbr.rel (0) target = $region17
  $region16: #{forward.4} parent=0 // pred_region
    _
  $region17: #{forward.4} parent=0 // pred_fallthru
    _
  // Predicated region
  $region18: #{forward.4} parent=0 // pred_check
    _
  $region19: #{forward.4} parent=0 // pred_check_branch
    %19 = sbr.rel (0) target = $region21
  $region20: #{forward.4} parent=0 // pred_region
    _
  $region21: #{forward.4} parent=0 // pred_fallthru
    _
  %v21 = vld [vmem:[%s0] sm:$0xff]
  %v22 = vld [vmem:[%s0 + $0x8] sm:$0xff]
  %v23 = vld [vmem:[%s0 + $0x10] sm:$0xff]
  %v24 = vld [vmem:[%s0 + $0x18] sm:$0xff]
  %v25 = vpack.c.bf16 %v23, %v21
  %v26 = vpack.c.bf16 %v24, %v22
  %v27 = vld [vmem:[%s1] sm:$0xff]
  %v28 = vld [vmem:[%s1 + $0x8] sm:$0xff]
  %v29 = vld [vmem:[%s1 + $0x10] sm:$0xff]
  %v30 = vld [vmem:[%s1 + $0x18] sm:$0xff]
  %v31 = vld [vmem:[%s1 + $0x20] sm:$0xff]
  %v32 = vld [vmem:[%s1 + $0x28] sm:$0xff]
  %v33 = vld [vmem:[%s1 + $0x30] sm:$0xff]
  %v34 = vld [vmem:[%s1 + $0x38] sm:$0xff]
  %v35 = vld [vmem:[%s1 + $0x40] sm:$0xff]
  %v36 = vld [vmem:[%s1 + $0x48] sm:$0xff]
  %v37 = vld [vmem:[%s1 + $0x50] sm:$0xff]
  %v38 = vld [vmem:[%s1 + $0x58] sm:$0xff]
  %v39 = vld [vmem:[%s1 + $0x60] sm:$0xff]
  %v40 = vld [vmem:[%s1 + $0x68] sm:$0xff]
  %v41 = vld [vmem:[%s1 + $0x70] sm:$0xff]
  %v42 = vld [vmem:[%s1 + $0x78] sm:$0xff]
  %v43 = vld [vmem:[%s1 + $0x80] sm:$0xff]
  %v44 = vld [vmem:[%s1 + $0x88] sm:$0xff]
  %v45 = vld [vmem:[%s1 + $0x90] sm:$0xff]
  %v46 = vld [vmem:[%s1 + $0x98] sm:$0xff]
  %v47 = vld [vmem:[%s1 + $0xa0] sm:$0xff]
  %v48 = vld [vmem:[%s1 + $0xa8] sm:$0xff]
  %v49 = vld [vmem:[%s1 + $0xb0] sm:$0xff]
  %v50 = vld [vmem:[%s1 + $0xb8] sm:$0xff]
  %v51 = vld [vmem:[%s1 + $0xc0] sm:$0xff]
  %v52 = vld [vmem:[%s1 + $0xc8] sm:$0xff]
  %v53 = vld [vmem:[%s1 + $0xd0] sm:$0xff]
  %v54 = vld [vmem:[%s1 + $0xd8] sm:$0xff]
  %v55 = vld [vmem:[%s1 + $0xe0] sm:$0xff]
  %v56 = vld [vmem:[%s1 + $0xe8] sm:$0xff]
  %v57 = vld [vmem:[%s1 + $0xf0] sm:$0xff]
  %v58 = vld [vmem:[%s1 + $0xf8] sm:$0xff]
  %v59 = vld [vmem:[%s2] sm:$0x3]
  %v61 = vlaneseq
  %v62 = vshrl.u32 %v61, 7
  %v63 = vsub.s32 0, %v62
  %v64 = vrot.slane %v59, %v63
  %v65 = vlaneseq
  %v66 = vshrl.u32 %v65, 7
  %v67 = vsub.s32 1, %v66
  %v68 = vrot.slane %v59, %v67
  %v103 = vunpack.c.l.b16 %v27
  %v104 = vunpack.c.h.b16 %v27
  %v105 = vunpack.c.l.b16 %v28
  %v106 = vunpack.c.h.b16 %v28
  %v107 = vunpack.c.l.b16 %v29
  %v108 = vunpack.c.h.b16 %v29
  %v109 = vunpack.c.l.b16 %v30
  %v110 = vunpack.c.h.b16 %v30
  %v111 = vunpack.c.l.b16 %v31
  %v112 = vunpack.c.h.b16 %v31
  %v113 = vunpack.c.l.b16 %v32
  %v114 = vunpack.c.h.b16 %v32
  %v115 = vunpack.c.l.b16 %v33
  %v116 = vunpack.c.h.b16 %v33
  %v117 = vunpack.c.l.b16 %v34
  %v118 = vunpack.c.h.b16 %v34
  %v119 = vunpack.c.l.b16 %v35
  %v120 = vunpack.c.h.b16 %v35
  %v121 = vunpack.c.l.b16 %v36
  %v122 = vunpack.c.h.b16 %v36
  %v123 = vunpack.c.l.b16 %v37
  %v124 = vunpack.c.h.b16 %v37
  %v125 = vunpack.c.l.b16 %v38
  %v126 = vunpack.c.h.b16 %v38
  %v127 = vunpack.c.l.b16 %v39
  %v128 = vunpack.c.h.b16 %v39
  %v129 = vunpack.c.l.b16 %v40
  %v130 = vunpack.c.h.b16 %v40
  %v131 = vunpack.c.l.b16 %v41
  %v132 = vunpack.c.h.b16 %v41
  %v133 = vunpack.c.l.b16 %v42
  %v134 = vunpack.c.h.b16 %v42
  %v135 = vunpack.c.l.b16 %v43
  %v136 = vunpack.c.h.b16 %v43
  %v137 = vunpack.c.l.b16 %v44
  %v138 = vunpack.c.h.b16 %v44
  %v139 = vunpack.c.l.b16 %v45
  %v140 = vunpack.c.h.b16 %v45
  %v141 = vunpack.c.l.b16 %v46
  %v142 = vunpack.c.h.b16 %v46
  %v143 = vunpack.c.l.b16 %v47
  %v144 = vunpack.c.h.b16 %v47
  %v145 = vunpack.c.l.b16 %v48
  %v146 = vunpack.c.h.b16 %v48
  %v147 = vunpack.c.l.b16 %v49
  %v148 = vunpack.c.h.b16 %v49
  %v149 = vunpack.c.l.b16 %v50
  %v150 = vunpack.c.h.b16 %v50
  %v151 = vunpack.c.l.b16 %v51
  %v152 = vunpack.c.h.b16 %v51
  %v153 = vunpack.c.l.b16 %v52
  %v154 = vunpack.c.h.b16 %v52
  %v155 = vunpack.c.l.b16 %v53
  %v156 = vunpack.c.h.b16 %v53
  %v157 = vunpack.c.l.b16 %v54
  %v158 = vunpack.c.h.b16 %v54
  %v159 = vunpack.c.l.b16 %v55
  %v160 = vunpack.c.h.b16 %v55
  %v161 = vunpack.c.l.b16 %v56
  %v162 = vunpack.c.h.b16 %v56
  %v163 = vunpack.c.l.b16 %v57
  %v164 = vunpack.c.h.b16 %v57
  %v165 = vunpack.c.l.b16 %v58
  %v166 = vunpack.c.h.b16 %v58
  %v167 = vpack.c.b16 %v105, %v103
  %v168 = vpack.c.b16 %v106, %v104
  %v169 = vpack.c.b16 %v109, %v107
  %v170 = vpack.c.b16 %v110, %v108
  %v171 = vpack.c.b16 %v113, %v111
  %v172 = vpack.c.b16 %v114, %v112
  %v173 = vpack.c.b16 %v117, %v115
  %v174 = vpack.c.b16 %v118, %v116
  %v175 = vpack.c.b16 %v121, %v119
  %v176 = vpack.c.b16 %v122, %v120
  %v177 = vpack.c.b16 %v125, %v123
  %v178 = vpack.c.b16 %v126, %v124
  %v179 = vpack.c.b16 %v129, %v127
  %v180 = vpack.c.b16 %v130, %v128
  %v181 = vpack.c.b16 %v133, %v131
  %v182 = vpack.c.b16 %v134, %v132
  %v183 = vpack.c.b16 %v137, %v135
  %v184 = vpack.c.b16 %v138, %v136
  %v185 = vpack.c.b16 %v141, %v139
  %v186 = vpack.c.b16 %v142, %v140
  %v187 = vpack.c.b16 %v145, %v143
  %v188 = vpack.c.b16 %v146, %v144
  %v189 = vpack.c.b16 %v149, %v147
  %v190 = vpack.c.b16 %v150, %v148
  %v191 = vpack.c.b16 %v153, %v151
  %v192 = vpack.c.b16 %v154, %v152
  %v193 = vpack.c.b16 %v157, %v155
  %v194 = vpack.c.b16 %v158, %v156
  %v195 = vpack.c.b16 %v161, %v159
  %v196 = vpack.c.b16 %v162, %v160
  %v197 = vpack.c.b16 %v165, %v163
  %v198 = vpack.c.b16 %v166, %v164
  %231 = vmatprep.subr.bf16.mxu0 %v182
  %232 = vmatpush1.bf16.msra.mxu0 %v181
  %233 = vmatprep.subr.bf16.mxu0 %v180
  %234 = vmatpush1.bf16.msra.mxu0 %v179
  %235 = vmatprep.subr.bf16.mxu0 %v178
  %236 = vmatpush1.bf16.msra.mxu0 %v177
  %237 = vmatprep.subr.bf16.mxu0 %v176
  %238 = vmatpush1.bf16.msra.mxu0 %v175
  %239 = vmatprep.subr.bf16.mxu0 %v174
  %240 = vmatpush1.bf16.msra.mxu0 %v173
  %241 = vmatprep.subr.bf16.mxu0 %v172
  %242 = vmatpush1.bf16.msra.mxu0 %v171
  %243 = vmatprep.subr.bf16.mxu0 %v170
  %244 = vmatpush1.bf16.msra.mxu0 %v169
  %245 = vmatprep.subr.bf16.mxu0 %v168
  %246 = vmatpush1.bf16.msra.mxu0 %v167
  %247 = vmatprep.subr.bf16.mxu0 %v198
  %248 = vmatpush2.bf16.msra.mxu0 %v197
  %249 = vmatprep.subr.bf16.mxu0 %v196
  %250 = vmatpush2.bf16.msra.mxu0 %v195
  %251 = vmatprep.subr.bf16.mxu0 %v194
  %252 = vmatpush2.bf16.msra.mxu0 %v193
  %253 = vmatprep.subr.bf16.mxu0 %v192
  %254 = vmatpush2.bf16.msra.mxu0 %v191
  %255 = vmatprep.subr.bf16.mxu0 %v190
  %256 = vmatpush2.bf16.msra.mxu0 %v189
  %257 = vmatprep.subr.bf16.mxu0 %v188
  %258 = vmatpush2.bf16.msra.mxu0 %v187
  %259 = vmatprep.subr.bf16.mxu0 %v186
  %260 = vmatpush2.bf16.msra.mxu0 %v185
  %261 = vmatprep.subr.bf16.mxu0 %v184
  %262 = vmatpush2.bf16.msra.mxu0 %v183
  %263 = vmatprep.mubr.bf16.mxu0 %v26
  %264 = vmatmul.mubr.bf16.gmra.mxu0 %v25
  %v265 = vpop.f32.mrf.mxu0
  %v266 = vadd.f32 %v64, %v265
  %v267 = vpop.f32.mrf.mxu0
  %v268 = vadd.f32 %v68, %v267
  %v269 = vpop.f32.mrf.mxu0
  %v270 = vadd.f32 %v64, %v269
  %v271 = vpop.f32.mrf.mxu0
  %v272 = vadd.f32 %v68, %v271
  %273 = vdwg.mxu0
  %v274 = vxor.u32 %v266, 2147483648
  %v275 = vxor.u32 %v268, 2147483648
  %v276 = vxor.u32 %v270, 2147483648
  %v277 = vxor.u32 %v272, 2147483648
  %v278 = vmul.f32 %v274, 1.442695
  %v279 = vpow.pop %v278
  %v280 = vmul.f32 %v275, 1.442695
  %v281 = vpow.pop %v280
  %v282 = vmul.f32 %v276, 1.442695
  %v283 = vpow.pop %v282
  %v284 = vmul.f32 %v277, 1.442695
  %v285 = vpow.pop %v284
  %v286 = vadd.f32 %v279, 1.0
  %v287 = vadd.f32 %v281, 1.0
  %v288 = vadd.f32 %v283, 1.0
  %v289 = vadd.f32 %v285, 1.0
  %v290 = vrcp.pop %v286
  %v291 = vmul.f32 1.0, %v290
  %v292 = vrcp.pop %v287
  %v293 = vmul.f32 1.0, %v292
  %v294 = vrcp.pop %v288
  %v295 = vmul.f32 1.0, %v294
  %v296 = vrcp.pop %v289
  %v297 = vmul.f32 1.0, %v296
  %v298 = vmul.f32 %v266, %v291
  %v299 = vmul.f32 %v268, %v293
  %v300 = vmul.f32 %v270, %v295
  %v301 = vmul.f32 %v272, %v297
  %v302 = vpack.c.bf16 %v300, %v298
  %v303 = vpack.c.bf16 %v301, %v299
  %v304 = vld [vmem:[%s3] sm:$0xf]
  %v305 = vld [vmem:[%s3 + $0x4] sm:$0xf]
  %v306 = vld [vmem:[%s3 + $0x8] sm:$0xf]
  %v307 = vld [vmem:[%s3 + $0xc] sm:$0xf]
  %v308 = vld [vmem:[%s3 + $0x10] sm:$0xf]
  %v309 = vld [vmem:[%s3 + $0x14] sm:$0xf]
  %v310 = vld [vmem:[%s3 + $0x18] sm:$0xf]
  %v311 = vld [vmem:[%s3 + $0x1c] sm:$0xf]
  %v312 = vld [vmem:[%s3 + $0x20] sm:$0xf]
  %v313 = vld [vmem:[%s3 + $0x24] sm:$0xf]
  %v314 = vld [vmem:[%s3 + $0x28] sm:$0xf]
  %v315 = vld [vmem:[%s3 + $0x2c] sm:$0xf]
  %v316 = vld [vmem:[%s3 + $0x30] sm:$0xf]
  %v317 = vld [vmem:[%s3 + $0x34] sm:$0xf]
  %v318 = vld [vmem:[%s3 + $0x38] sm:$0xf]
  %v319 = vld [vmem:[%s3 + $0x3c] sm:$0xf]
  %v320 = vld [vmem:[%s3 + $0x40] sm:$0xf]
  %v321 = vld [vmem:[%s3 + $0x44] sm:$0xf]
  %v322 = vld [vmem:[%s3 + $0x48] sm:$0xf]
  %v323 = vld [vmem:[%s3 + $0x4c] sm:$0xf]
  %v324 = vld [vmem:[%s3 + $0x50] sm:$0xf]
  %v325 = vld [vmem:[%s3 + $0x54] sm:$0xf]
  %v326 = vld [vmem:[%s3 + $0x58] sm:$0xf]
  %v327 = vld [vmem:[%s3 + $0x5c] sm:$0xf]
  %v328 = vld [vmem:[%s3 + $0x60] sm:$0xf]
  %v329 = vld [vmem:[%s3 + $0x64] sm:$0xf]
  %v330 = vld [vmem:[%s3 + $0x68] sm:$0xf]
  %v331 = vld [vmem:[%s3 + $0x6c] sm:$0xf]
  %v332 = vld [vmem:[%s3 + $0x70] sm:$0xf]
  %v333 = vld [vmem:[%s3 + $0x74] sm:$0xf]
  %v334 = vld [vmem:[%s3 + $0x78] sm:$0xf]
  %v335 = vld [vmem:[%s3 + $0x7c] sm:$0xf]
  %v336 = vld [vmem:[%s4] sm:$0x1]
  %v338 = vlaneseq
  %v339 = vshrl.u32 %v338, 7
  %v340 = vsub.s32 0, %v339
  %v341 = vrot.slane %v336, %v340
  %v375 = vunpack.c.l.b16 %v304
  %v376 = vunpack.c.l.b16 %v305
  %v377 = vunpack.c.l.b16 %v306
  %v378 = vunpack.c.l.b16 %v307
  %v379 = vunpack.c.l.b16 %v308
  %v380 = vunpack.c.l.b16 %v309
  %v381 = vunpack.c.l.b16 %v310
  %v382 = vunpack.c.l.b16 %v311
  %v383 = vunpack.c.l.b16 %v312
  %v384 = vunpack.c.l.b16 %v313
  %v385 = vunpack.c.l.b16 %v314
  %v386 = vunpack.c.l.b16 %v315
  %v387 = vunpack.c.l.b16 %v316
  %v388 = vunpack.c.l.b16 %v317
  %v389 = vunpack.c.l.b16 %v318
  %v390 = vunpack.c.l.b16 %v319
  %v391 = vunpack.c.l.b16 %v320
  %v392 = vunpack.c.l.b16 %v321
  %v393 = vunpack.c.l.b16 %v322
  %v394 = vunpack.c.l.b16 %v323
  %v395 = vunpack.c.l.b16 %v324
  %v396 = vunpack.c.l.b16 %v325
  %v397 = vunpack.c.l.b16 %v326
  %v398 = vunpack.c.l.b16 %v327
  %v399 = vunpack.c.l.b16 %v328
  %v400 = vunpack.c.l.b16 %v329
  %v401 = vunpack.c.l.b16 %v330
  %v402 = vunpack.c.l.b16 %v331
  %v403 = vunpack.c.l.b16 %v332
  %v404 = vunpack.c.l.b16 %v333
  %v405 = vunpack.c.l.b16 %v334
  %v406 = vunpack.c.l.b16 %v335
  %v407 = vpack.c.b16 %v376, %v375
  %v408 = vpack.c.b16 %v378, %v377
  %v409 = vpack.c.b16 %v380, %v379
  %v410 = vpack.c.b16 %v382, %v381
  %v411 = vpack.c.b16 %v384, %v383
  %v412 = vpack.c.b16 %v386, %v385
  %v413 = vpack.c.b16 %v388, %v387
  %v414 = vpack.c.b16 %v390, %v389
  %v415 = vpack.c.b16 %v392, %v391
  %v416 = vpack.c.b16 %v394, %v393
  %v417 = vpack.c.b16 %v396, %v395
  %v418 = vpack.c.b16 %v398, %v397
  %v419 = vpack.c.b16 %v400, %v399
  %v420 = vpack.c.b16 %v402, %v401
  %v421 = vpack.c.b16 %v404, %v403
  %v422 = vpack.c.b16 %v406, %v405
  %439 = vmatprep.subr.bf16.mxu0 0
  %440 = vmatpush1.bf16.msra.mxu0 %v414
  %441 = vmatprep.subr.bf16.mxu0 0
  %442 = vmatpush1.bf16.msra.mxu0 %v413
  %443 = vmatprep.subr.bf16.mxu0 0
  %444 = vmatpush1.bf16.msra.mxu0 %v412
  %445 = vmatprep.subr.bf16.mxu0 0
  %446 = vmatpush1.bf16.msra.mxu0 %v411
  %447 = vmatprep.subr.bf16.mxu0 0
  %448 = vmatpush1.bf16.msra.mxu0 %v410
  %449 = vmatprep.subr.bf16.mxu0 0
  %450 = vmatpush1.bf16.msra.mxu0 %v409
  %451 = vmatprep.subr.bf16.mxu0 0
  %452 = vmatpush1.bf16.msra.mxu0 %v408
  %453 = vmatprep.subr.bf16.mxu0 0
  %454 = vmatpush1.bf16.msra.mxu0 %v407
  %455 = vmatprep.subr.bf16.mxu0 0
  %456 = vmatpush2.bf16.msra.mxu0 %v422
  %457 = vmatprep.subr.bf16.mxu0 0
  %458 = vmatpush2.bf16.msra.mxu0 %v421
  %459 = vmatprep.subr.bf16.mxu0 0
  %460 = vmatpush2.bf16.msra.mxu0 %v420
  %461 = vmatprep.subr.bf16.mxu0 0
  %462 = vmatpush2.bf16.msra.mxu0 %v419
  %463 = vmatprep.subr.bf16.mxu0 0
  %464 = vmatpush2.bf16.msra.mxu0 %v418
  %465 = vmatprep.subr.bf16.mxu0 0
  %466 = vmatpush2.bf16.msra.mxu0 %v417
  %467 = vmatprep.subr.bf16.mxu0 0
  %468 = vmatpush2.bf16.msra.mxu0 %v416
  %469 = vmatprep.subr.bf16.mxu0 0
  %470 = vmatpush2.bf16.msra.mxu0 %v415
  %471 = vmatprep.mubr.bf16.mxu0 %v303
  %472 = vmatmul.mubr.bf16.gmra.mxu0 %v302
  %v473 = vpop.f32.mrf.mxu0
  %v474 = vadd.f32 %v341, %v473
  %v475 = vpop.f32.mrf.mxu0
  %v476 = vpop.f32.mrf.mxu0
  %v477 = vadd.f32 %v341, %v476
  %v478 = vpop.f32.mrf.mxu0
  %479 = vdwg.mxu0
  %480 = vst [vmem:[%s5] sm:$0xff] %v474
  %481 = vst [vmem:[%s5 + $0x8] sm:$0xff] %v477
  // Predicated region
  $region22: #{forward.4} parent=0 // pred_check
    _
  $region23: #{forward.4} parent=0 // pred_check_branch
    %483 = sbr.rel (0) target = $region25
  $region24: #{forward.4} parent=0 // pred_region
    _
  $region25: #{forward.4} parent=0 // pred_fallthru
    _
  // Predicated region
  $region26: #{forward.4} parent=0 // pred_check
    _
  $region27: #{forward.4} parent=0 // pred_check_branch
    %485 = sbr.rel (0) target = $region29
  $region28: #{forward.4} parent=0 // pred_region
    _
  $region29: #{forward.4} parent=0 // pred_fallthru
    _

// kernel: forward.3
$region0: #{forward.3}
  #allocation0 [shape = 'u32[]', space=smem, size = 0x4, offset = 0x4, fixed_abs, tag = 'smem constant byte address 0x4 - core index']
  #allocation1 [shape = 'u32[144,128]{1,0:T(1,128)}', space=vmem, size = 0x12000, scoped, tag = 'internal scratch']
  %s0 = inlined_call_operand.vmem [shape: f32[8,256], index: 0, kind: input, shape index: {}]
  %s1 = inlined_call_operand.vmem [shape: bf16[256,256], index: 1, kind: input, shape index: {}]
  %s2 = inlined_call_operand.vmem [shape: f32[1,256], index: 2, kind: input, shape index: {}]
  %s3 = inlined_call_operand.vmem [shape: bf16[256,128], index: 3, kind: input, shape index: {}]
  %s4 = inlined_call_operand.vmem [shape: f32[1,128], index: 4, kind: input, shape index: {}]
  %s5 = inlined_call_operand.vmem [shape: f32[8,128], index: 5, kind: output, shape index: {}]
  %s6 = sld [smem:[#allocation0]]
  $region30: #{forward.3} parent=0
    _
  %s8 = ssub.s32 1, %s6
  %s9 = scalar_select 0, %s8, %s6
  // Predicated region
  $region2: #{forward.3} parent=0 // pred_check
    _
  $region3: #{forward.3} parent=0 // pred_check_branch
    %11 = sbr.rel (0) target = $region5
  $region4: #{forward.3} parent=0 // pred_region
    _
  $region5: #{forward.3} parent=0 // pred_fallthru
    _
  // Predicated region
  $region6: #{forward.3} parent=0 // pred_check
    _
  $region7: #{forward.3} parent=0 // pred_check_branch
    %13 = sbr.rel (0) target = $region9
  $region8: #{forward.3} parent=0 // pred_region
    _
  $region9: #{forward.3} parent=0 // pred_fallthru
    _
  // Predicated region
  $region10: #{forward.3} parent=0 // pred_check
    _
  $region11: #{forward.3} parent=0 // pred_check_branch
    %15 = sbr.rel (0) target = $region13
  $region12: #{forward.3} parent=0 // pred_region
    _
  $region13: #{forward.3} parent=0 // pred_fallthru
    _
  // Predicated region
  $region14: #{forward.3} parent=0 // pred_check
    _
  $region15: #{forward.3} parent=0 // pred_check_branch
    %17 = sbr.rel (0) target = $region17
  $region16: #{forward.3} parent=0 // pred_region
    _
  $region17: #{forward.3} parent=0 // pred_fallthru
    _
  // Predicated region
  $region18: #{forward.3} parent=0 // pred_check
    _
  $region19: #{forward.3} parent=0 // pred_check_branch
    %19 = sbr.rel (0) target = $region21
  $region20: #{forward.3} parent=0 // pred_region
    _
  $region21: #{forward.3} parent=0 // pred_fallthru
    _
  %v21 = vld [vmem:[%s0] sm:$0xff]
  %v22 = vld [vmem:[%s0 + $0x8] sm:$0xff]
  %v23 = vpack.c.bf16 %v21, %v21
  %v24 = vpack.c.bf16 %v22, %v22
  %v25 = vld [vmem:[%s1] sm:$0xff]
  %v26 = vld [vmem:[%s1 + $0x8] sm:$0xff]
  %v27 = vld [vmem:[%s1 + $0x10] sm:$0xff]
  %v28 = vld [vmem:[%s1 + $0x18] sm:$0xff]
  %v29 = vld [vmem:[%s1 + $0x20] sm:$0xff]
  %v30 = vld [vmem:[%s1 + $0x28] sm:$0xff]
  %v31 = vld [vmem:[%s1 + $0x30] sm:$0xff]
  %v32 = vld [vmem:[%s1 + $0x38] sm:$0xff]
  %v33 = vld [vmem:[%s1 + $0x40] sm:$0xff]
  %v34 = vld [vmem:[%s1 + $0x48] sm:$0xff]
  %v35 = vld [vmem:[%s1 + $0x50] sm:$0xff]
  %v36 = vld [vmem:[%s1 + $0x58] sm:$0xff]
  %v37 = vld [vmem:[%s1 + $0x60] sm:$0xff]
  %v38 = vld [vmem:[%s1 + $0x68] sm:$0xff]
  %v39 = vld [vmem:[%s1 + $0x70] sm:$0xff]
  %v40 = vld [vmem:[%s1 + $0x78] sm:$0xff]
  %v41 = vld [vmem:[%s1 + $0x80] sm:$0xff]
  %v42 = vld [vmem:[%s1 + $0x88] sm:$0xff]
  %v43 = vld [vmem:[%s1 + $0x90] sm:$0xff]
  %v44 = vld [vmem:[%s1 + $0x98] sm:$0xff]
  %v45 = vld [vmem:[%s1 + $0xa0] sm:$0xff]
  %v46 = vld [vmem:[%s1 + $0xa8] sm:$0xff]
  %v47 = vld [vmem:[%s1 + $0xb0] sm:$0xff]
  %v48 = vld [vmem:[%s1 + $0xb8] sm:$0xff]
  %v49 = vld [vmem:[%s1 + $0xc0] sm:$0xff]
  %v50 = vld [vmem:[%s1 + $0xc8] sm:$0xff]
  %v51 = vld [vmem:[%s1 + $0xd0] sm:$0xff]
  %v52 = vld [vmem:[%s1 + $0xd8] sm:$0xff]
  %v53 = vld [vmem:[%s1 + $0xe0] sm:$0xff]
  %v54 = vld [vmem:[%s1 + $0xe8] sm:$0xff]
  %v55 = vld [vmem:[%s1 + $0xf0] sm:$0xff]
  %v56 = vld [vmem:[%s1 + $0xf8] sm:$0xff]
  %v57 = vld [vmem:[%s2] sm:$0x3]
  %v59 = vlaneseq
  %v60 = vshrl.u32 %v59, 7
  %v61 = vsub.s32 0, %v60
  %v62 = vrot.slane %v57, %v61
  %v63 = vlaneseq
  %v64 = vshrl.u32 %v63, 7
  %v65 = vsub.s32 1, %v64
  %v66 = vrot.slane %v57, %v65
  %v101 = vunpack.c.l.b16 %v25
  %v102 = vunpack.c.h.b16 %v25
  %v103 = vunpack.c.l.b16 %v26
  %v104 = vunpack.c.h.b16 %v26
  %v105 = vunpack.c.l.b16 %v27
  %v106 = vunpack.c.h.b16 %v27
  %v107 = vunpack.c.l.b16 %v28
  %v108 = vunpack.c.h.b16 %v28
  %v109 = vunpack.c.l.b16 %v29
  %v110 = vunpack.c.h.b16 %v29
  %v111 = vunpack.c.l.b16 %v30
  %v112 = vunpack.c.h.b16 %v30
  %v113 = vunpack.c.l.b16 %v31
  %v114 = vunpack.c.h.b16 %v31
  %v115 = vunpack.c.l.b16 %v32
  %v116 = vunpack.c.h.b16 %v32
  %v117 = vunpack.c.l.b16 %v33
  %v118 = vunpack.c.h.b16 %v33
  %v119 = vunpack.c.l.b16 %v34
  %v120 = vunpack.c.h.b16 %v34
  %v121 = vunpack.c.l.b16 %v35
  %v122 = vunpack.c.h.b16 %v35
  %v123 = vunpack.c.l.b16 %v36
  %v124 = vunpack.c.h.b16 %v36
  %v125 = vunpack.c.l.b16 %v37
  %v126 = vunpack.c.h.b16 %v37
  %v127 = vunpack.c.l.b16 %v38
  %v128 = vunpack.c.h.b16 %v38
  %v129 = vunpack.c.l.b16 %v39
  %v130 = vunpack.c.h.b16 %v39
  %v131 = vunpack.c.l.b16 %v40
  %v132 = vunpack.c.h.b16 %v40
  %v133 = vunpack.c.l.b16 %v41
  %v134 = vunpack.c.h.b16 %v41
  %v135 = vunpack.c.l.b16 %v42
  %v136 = vunpack.c.h.b16 %v42
  %v137 = vunpack.c.l.b16 %v43
  %v138 = vunpack.c.h.b16 %v43
  %v139 = vunpack.c.l.b16 %v44
  %v140 = vunpack.c.h.b16 %v44
  %v141 = vunpack.c.l.b16 %v45
  %v142 = vunpack.c.h.b16 %v45
  %v143 = vunpack.c.l.b16 %v46
  %v144 = vunpack.c.h.b16 %v46
  %v145 = vunpack.c.l.b16 %v47
  %v146 = vunpack.c.h.b16 %v47
  %v147 = vunpack.c.l.b16 %v48
  %v148 = vunpack.c.h.b16 %v48
  %v149 = vunpack.c.l.b16 %v49
  %v150 = vunpack.c.h.b16 %v49
  %v151 = vunpack.c.l.b16 %v50
  %v152 = vunpack.c.h.b16 %v50
  %v153 = vunpack.c.l.b16 %v51
  %v154 = vunpack.c.h.b16 %v51
  %v155 = vunpack.c.l.b16 %v52
  %v156 = vunpack.c.h.b16 %v52
  %v157 = vunpack.c.l.b16 %v53
  %v158 = vunpack.c.h.b16 %v53
  %v159 = vunpack.c.l.b16 %v54
  %v160 = vunpack.c.h.b16 %v54
  %v161 = vunpack.c.l.b16 %v55
  %v162 = vunpack.c.h.b16 %v55
  %v163 = vunpack.c.l.b16 %v56
  %v164 = vunpack.c.h.b16 %v56
  %v165 = vpack.c.b16 %v103, %v101
  %v166 = vpack.c.b16 %v104, %v102
  %v167 = vpack.c.b16 %v107, %v105
  %v168 = vpack.c.b16 %v108, %v106
  %v169 = vpack.c.b16 %v111, %v109
  %v170 = vpack.c.b16 %v112, %v110
  %v171 = vpack.c.b16 %v115, %v113
  %v172 = vpack.c.b16 %v116, %v114
  %v173 = vpack.c.b16 %v119, %v117
  %v174 = vpack.c.b16 %v120, %v118
  %v175 = vpack.c.b16 %v123, %v121
  %v176 = vpack.c.b16 %v124, %v122
  %v177 = vpack.c.b16 %v127, %v125
  %v178 = vpack.c.b16 %v128, %v126
  %v179 = vpack.c.b16 %v131, %v129
  %v180 = vpack.c.b16 %v132, %v130
  %v181 = vpack.c.b16 %v135, %v133
  %v182 = vpack.c.b16 %v136, %v134
  %v183 = vpack.c.b16 %v139, %v137
  %v184 = vpack.c.b16 %v140, %v138
  %v185 = vpack.c.b16 %v143, %v141
  %v186 = vpack.c.b16 %v144, %v142
  %v187 = vpack.c.b16 %v147, %v145
  %v188 = vpack.c.b16 %v148, %v146
  %v189 = vpack.c.b16 %v151, %v149
  %v190 = vpack.c.b16 %v152, %v150
  %v191 = vpack.c.b16 %v155, %v153
  %v192 = vpack.c.b16 %v156, %v154
  %v193 = vpack.c.b16 %v159, %v157
  %v194 = vpack.c.b16 %v160, %v158
  %v195 = vpack.c.b16 %v163, %v161
  %v196 = vpack.c.b16 %v164, %v162
  %229 = vmatprep.subr.bf16.mxu0 %v180
  %230 = vmatpush1.bf16.msra.mxu0 %v179
  %231 = vmatprep.subr.bf16.mxu0 %v178
  %232 = vmatpush1.bf16.msra.mxu0 %v177
  %233 = vmatprep.subr.bf16.mxu0 %v176
  %234 = vmatpush1.bf16.msra.mxu0 %v175
  %235 = vmatprep.subr.bf16.mxu0 %v174
  %236 = vmatpush1.bf16.msra.mxu0 %v173
  %237 = vmatprep.subr.bf16.mxu0 %v172
  %238 = vmatpush1.bf16.msra.mxu0 %v171
  %239 = vmatprep.subr.bf16.mxu0 %v170
  %240 = vmatpush1.bf16.msra.mxu0 %v169
  %241 = vmatprep.subr.bf16.mxu0 %v168
  %242 = vmatpush1.bf16.msra.mxu0 %v167
  %243 = vmatprep.subr.bf16.mxu0 %v166
  %244 = vmatpush1.bf16.msra.mxu0 %v165
  %245 = vmatprep.subr.bf16.mxu0 %v196
  %246 = vmatpush2.bf16.msra.mxu0 %v195
  %247 = vmatprep.subr.bf16.mxu0 %v194
  %248 = vmatpush2.bf16.msra.mxu0 %v193
  %249 = vmatprep.subr.bf16.mxu0 %v192
  %250 = vmatpush2.bf16.msra.mxu0 %v191
  %251 = vmatprep.subr.bf16.mxu0 %v190
  %252 = vmatpush2.bf16.msra.mxu0 %v189
  %253 = vmatprep.subr.bf16.mxu0 %v188
  %254 = vmatpush2.bf16.msra.mxu0 %v187
  %255 = vmatprep.subr.bf16.mxu0 %v186
  %256 = vmatpush2.bf16.msra.mxu0 %v185
  %257 = vmatprep.subr.bf16.mxu0 %v184
  %258 = vmatpush2.bf16.msra.mxu0 %v183
  %259 = vmatprep.subr.bf16.mxu0 %v182
  %260 = vmatpush2.bf16.msra.mxu0 %v181
  %261 = vmatprep.mubr.bf16.mxu0 %v24
  %262 = vmatmul.mubr.bf16.gmra.mxu0 %v23
  %v263 = vpop.f32.mrf.mxu0
  %v264 = vadd.f32 %v62, %v263
  %v265 = vpop.f32.mrf.mxu0
  %v266 = vadd.f32 %v66, %v265
  %v267 = vpop.f32.mrf.mxu0
  %v268 = vpop.f32.mrf.mxu0
  %269 = vdwg.mxu0
  %v270 = vxor.u32 %v264, 2147483648
  %v271 = vxor.u32 %v266, 2147483648
  %v272 = vmul.f32 %v270, 1.442695
  %v273 = vpow.pop %v272
  %v274 = vmul.f32 %v271, 1.442695
  %v275 = vpow.pop %v274
  %v276 = vadd.f32 %v273, 1.0
  %v277 = vadd.f32 %v275, 1.0
  %v278 = vrcp.pop %v276
  %v279 = vmul.f32 1.0, %v278
  %v280 = vrcp.pop %v277
  %v281 = vmul.f32 1.0, %v280
  %v282 = vmul.f32 %v264, %v279
  %v283 = vmul.f32 %v266, %v281
  %v284 = vpack.c.bf16 %v282, %v282
  %v285 = vpack.c.bf16 %v283, %v283
  %v286 = vld [vmem:[%s3] sm:$0xf]
  %v287 = vld [vmem:[%s3 + $0x4] sm:$0xf]
  %v288 = vld [vmem:[%s3 + $0x8] sm:$0xf]
  %v289 = vld [vmem:[%s3 + $0xc] sm:$0xf]
  %v290 = vld [vmem:[%s3 + $0x10] sm:$0xf]
  %v291 = vld [vmem:[%s3 + $0x14] sm:$0xf]
  %v292 = vld [vmem:[%s3 + $0x18] sm:$0xf]
  %v293 = vld [vmem:[%s3 + $0x1c] sm:$0xf]
  %v294 = vld [vmem:[%s3 + $0x20] sm:$0xf]
  %v295 = vld [vmem:[%s3 + $0x24] sm:$0xf]
  %v296 = vld [vmem:[%s3 + $0x28] sm:$0xf]
  %v297 = vld [vmem:[%s3 + $0x2c] sm:$0xf]
  %v298 = vld [vmem:[%s3 + $0x30] sm:$0xf]
  %v299 = vld [vmem:[%s3 + $0x34] sm:$0xf]
  %v300 = vld [vmem:[%s3 + $0x38] sm:$0xf]
  %v301 = vld [vmem:[%s3 + $0x3c] sm:$0xf]
  %v302 = vld [vmem:[%s3 + $0x40] sm:$0xf]
  %v303 = vld [vmem:[%s3 + $0x44] sm:$0xf]
  %v304 = vld [vmem:[%s3 + $0x48] sm:$0xf]
  %v305 = vld [vmem:[%s3 + $0x4c] sm:$0xf]
  %v306 = vld [vmem:[%s3 + $0x50] sm:$0xf]
  %v307 = vld [vmem:[%s3 + $0x54] sm:$0xf]
  %v308 = vld [vmem:[%s3 + $0x58] sm:$0xf]
  %v309 = vld [vmem:[%s3 + $0x5c] sm:$0xf]
  %v310 = vld [vmem:[%s3 + $0x60] sm:$0xf]
  %v311 = vld [vmem:[%s3 + $0x64] sm:$0xf]
  %v312 = vld [vmem:[%s3 + $0x68] sm:$0xf]
  %v313 = vld [vmem:[%s3 + $0x6c] sm:$0xf]
  %v314 = vld [vmem:[%s3 + $0x70] sm:$0xf]
  %v315 = vld [vmem:[%s3 + $0x74] sm:$0xf]
  %v316 = vld [vmem:[%s3 + $0x78] sm:$0xf]
  %v317 = vld [vmem:[%s3 + $0x7c] sm:$0xf]
  %v318 = vld [vmem:[%s4] sm:$0x1]
  %v320 = vlaneseq
  %v321 = vshrl.u32 %v320, 7
  %v322 = vsub.s32 0, %v321
  %v323 = vrot.slane %v318, %v322
  %v357 = vunpack.c.l.b16 %v286
  %v358 = vunpack.c.l.b16 %v287
  %v359 = vunpack.c.l.b16 %v288
  %v360 = vunpack.c.l.b16 %v289
  %v361 = vunpack.c.l.b16 %v290
  %v362 = vunpack.c.l.b16 %v291
  %v363 = vunpack.c.l.b16 %v292
  %v364 = vunpack.c.l.b16 %v293
  %v365 = vunpack.c.l.b16 %v294
  %v366 = vunpack.c.l.b16 %v295
  %v367 = vunpack.c.l.b16 %v296
  %v368 = vunpack.c.l.b16 %v297
  %v369 = vunpack.c.l.b16 %v298
  %v370 = vunpack.c.l.b16 %v299
  %v371 = vunpack.c.l.b16 %v300
  %v372 = vunpack.c.l.b16 %v301
  %v373 = vunpack.c.l.b16 %v302
  %v374 = vunpack.c.l.b16 %v303
  %v375 = vunpack.c.l.b16 %v304
  %v376 = vunpack.c.l.b16 %v305
  %v377 = vunpack.c.l.b16 %v306
  %v378 = vunpack.c.l.b16 %v307
  %v379 = vunpack.c.l.b16 %v308
  %v380 = vunpack.c.l.b16 %v309
  %v381 = vunpack.c.l.b16 %v310
  %v382 = vunpack.c.l.b16 %v311
  %v383 = vunpack.c.l.b16 %v312
  %v384 = vunpack.c.l.b16 %v313
  %v385 = vunpack.c.l.b16 %v314
  %v386 = vunpack.c.l.b16 %v315
  %v387 = vunpack.c.l.b16 %v316
  %v388 = vunpack.c.l.b16 %v317
  %v389 = vpack.c.b16 %v358, %v357
  %v390 = vpack.c.b16 %v360, %v359
  %v391 = vpack.c.b16 %v362, %v361
  %v392 = vpack.c.b16 %v364, %v363
  %v393 = vpack.c.b16 %v366, %v365
  %v394 = vpack.c.b16 %v368, %v367
  %v395 = vpack.c.b16 %v370, %v369
  %v396 = vpack.c.b16 %v372, %v371
  %v397 = vpack.c.b16 %v374, %v373
  %v398 = vpack.c.b16 %v376, %v375
  %v399 = vpack.c.b16 %v378, %v377
  %v400 = vpack.c.b16 %v380, %v379
  %v401 = vpack.c.b16 %v382, %v381
  %v402 = vpack.c.b16 %v384, %v383
  %v403 = vpack.c.b16 %v386, %v385
  %v404 = vpack.c.b16 %v388, %v387
  %421 = vmatprep.subr.bf16.mxu0 0
  %422 = vmatpush1.bf16.msra.mxu0 %v396
  %423 = vmatprep.subr.bf16.mxu0 0
  %424 = vmatpush1.bf16.msra.mxu0 %v395
  %425 = vmatprep.subr.bf16.mxu0 0
  %426 = vmatpush1.bf16.msra.mxu0 %v394
  %427 = vmatprep.subr.bf16.mxu0 0
  %428 = vmatpush1.bf16.msra.mxu0 %v393
  %429 = vmatprep.subr.bf16.mxu0 0
  %430 = vmatpush1.bf16.msra.mxu0 %v392
  %431 = vmatprep.subr.bf16.mxu0 0
  %432 = vmatpush1.bf16.msra.mxu0 %v391
  %433 = vmatprep.subr.bf16.mxu0 0
  %434 = vmatpush1.bf16.msra.mxu0 %v390
  %435 = vmatprep.subr.bf16.mxu0 0
  %436 = vmatpush1.bf16.msra.mxu0 %v389
  %437 = vmatprep.subr.bf16.mxu0 0
  %438 = vmatpush2.bf16.msra.mxu0 %v404
  %439 = vmatprep.subr.bf16.mxu0 0
  %440 = vmatpush2.bf16.msra.mxu0 %v403
  %441 = vmatprep.subr.bf16.mxu0 0
  %442 = vmatpush2.bf16.msra.mxu0 %v402
  %443 = vmatprep.subr.bf16.mxu0 0
  %444 = vmatpush2.bf16.msra.mxu0 %v401
  %445 = vmatprep.subr.bf16.mxu0 0
  %446 = vmatpush2.bf16.msra.mxu0 %v400
  %447 = vmatprep.subr.bf16.mxu0 0
  %448 = vmatpush2.bf16.msra.mxu0 %v399
  %449 = vmatprep.subr.bf16.mxu0 0
  %450 = vmatpush2.bf16.msra.mxu0 %v398
  %451 = vmatprep.subr.bf16.mxu0 0
  %452 = vmatpush2.bf16.msra.mxu0 %v397
  %453 = vmatprep.mubr.bf16.mxu0 %v285
  %454 = vmatmul.mubr.bf16.gmra.mxu0 %v284
  %v455 = vpop.f32.mrf.mxu0
  %v456 = vadd.f32 %v323, %v455
  %v457 = vpop.f32.mrf.mxu0
  %v458 = vpop.f32.mrf.mxu0
  %v459 = vpop.f32.mrf.mxu0
  %460 = vdwg.mxu0
  %461 = vst [vmem:[%s5] sm:$0xff] %v456
  // Predicated region
  $region22: #{forward.3} parent=0 // pred_check
    _
  $region23: #{forward.3} parent=0 // pred_check_branch
    %463 = sbr.rel (0) target = $region25
  $region24: #{forward.3} parent=0 // pred_region
    _
  $region25: #{forward.3} parent=0 // pred_fallthru
    _
  // Predicated region
  $region26: #{forward.3} parent=0 // pred_check
    _
  $region27: #{forward.3} parent=0 // pred_check_branch
    %465 = sbr.rel (0) target = $region29
  $region28: #{forward.3} parent=0 // pred_region
    _
  $region29: #{forward.3} parent=0 // pred_fallthru
    _

</llo_original>
